<compile_context>
chip_gen: v6e
topology: v6e:2x2x1
jax: 0.10.0
libtpu: 0.0.40
codegen_flags: <defaults>
</compile_context>

<pallas_src>
import functools
import math

import jax
import jax.numpy as jnp
from jax import lax
from jax.experimental import pallas as pl
from jax.experimental.pallas import tpu as pltpu


def _self_attention_kernel(x_ref, wqkv_ref, bqkv_ref, wproj_ref, bproj_ref,
                           o_ref, *, n_head, approx_recip):
    """One batch element per grid step; all heads processed inside the step.

    x_ref:     (T, C)      input (batch dim squeezed), compute dtype
    wqkv_ref:  (C, 3C)     fused [q|k|v] projection weight (q cols pre-scaled)
    bqkv_ref:  (1, 3C) f32 fused [q|k|v] bias (q part pre-scaled)
    wproj_ref: (C, C)      output projection weight (transposed, head-major rows)
    bproj_ref: (1, C)  f32 output projection bias
    o_ref:     (T, C)      output (batch dim squeezed)
    """
    T, C = x_ref.shape
    hd = C // n_head
    cdt = x_ref.dtype                       # MXU operand dtype (bf16 or f32)

    x = x_ref[...]                                                    # (T, C)

    # Batch-wide fused qkv projection: one (T, C) @ (C, 3C) MXU matmul.
    # The 1/sqrt(hd) softmax scale is already folded into the q columns.
    qkv = jnp.dot(x, wqkv_ref[...],
                  preferred_element_type=jnp.float32) + bqkv_ref[...]  # (T,3C) f32

    qf = qkv[:, 0 * C:1 * C].astype(cdt)                              # (T, C)
    kf = qkv[:, 1 * C:2 * C].astype(cdt)                              # (T, C)
    vf = qkv[:, 2 * C:3 * C].astype(cdt)                              # (T, C)
    wp = wproj_ref[...]                                               # (C, C)

    # Accumulator starts from the broadcast output-projection bias (f32).
    acc = jnp.broadcast_to(bproj_ref[...], (T, C)).astype(jnp.float32)

    # Statically unrolled per-head loop (H is small; static slices, no dynamic
    # lane indexing needed).
    for h in range(n_head):
        lo, hi = h * hd, (h + 1) * hd
        q = qf[:, lo:hi]                                              # (T, hd)
        k = kf[:, lo:hi]                                              # (T, hd)
        v = vf[:, lo:hi]                                              # (T, hd)

        # scores = q @ k^T without materializing a transpose (contract minor).
        s = lax.dot_general(q, k, (((1,), (1,)), ((), ())),
                            preferred_element_type=jnp.float32)       # (T, T)

        # Numerically stable softmax stats in f32; normalization deferred.
        m = jnp.max(s, axis=-1, keepdims=True)
        p = jnp.exp(s - m)
        l = jnp.sum(p, axis=-1, keepdims=True)                        # (T, 1)

        # Unnormalized attn @ v, then normalize once (O(T*hd) not O(T^2)).
        y = jnp.dot(p.astype(cdt), v, preferred_element_type=jnp.float32)
        y = y * pl.reciprocal(l, approx=approx_recip)                 # (T, hd)

        # Head-merge folded into the output projection: acc += y_h @ Wproj_h.
        acc = acc + jnp.dot(y.astype(cdt), wp[lo:hi, :],
                            preferred_element_type=jnp.float32)       # (T, C)

    o_ref[...] = acc.astype(o_ref.dtype)


def self_attention(x, w_attn, b_attn, w_proj, b_proj, *, n_head,
                   compute_dtype=jnp.bfloat16):
    """x: (B, T, C). w_attn: (3C, C), w_proj: (C, C) in PyTorch nn.Linear layout."""
    B, T, C = x.shape
    assert C % n_head == 0
    hd = C // n_head
    scale = 1.0 / math.sqrt(hd)
    f32 = jnp.float32

    # ---- host-side (XLA) weight re-layout ----
    # nn.Linear computes x @ W.T + b, so the kernel consumes W.T.
    wqkv_t = w_attn.astype(f32).T                                     # (C, 3C)
    wqkv = jnp.concatenate(
        [wqkv_t[:, :C] * scale, wqkv_t[:, C:]], axis=1
    ).astype(compute_dtype)                                           # (C, 3C)

    b = b_attn.astype(f32)
    bqkv = jnp.concatenate([b[:C] * scale, b[C:]]).reshape(1, 3 * C)  # f32

    wproj_t = w_proj.astype(f32).T.astype(compute_dtype)              # (C, C)
    bproj = b_proj.astype(f32).reshape(1, C)                          # f32

    x_c = x.astype(compute_dtype)
    approx = (compute_dtype != jnp.float32)

    kernel = functools.partial(_self_attention_kernel,
                               n_head=n_head, approx_recip=approx)

    return pl.pallas_call(
        kernel,
        out_shape=jax.ShapeDtypeStruct((B, T, C), x.dtype),
        grid_spec=pltpu.PrefetchScalarGridSpec(
            num_scalar_prefetch=0,
            grid=(B,),
            in_specs=[
                # x: one (T, C) block per batch element.
                pl.BlockSpec((pl.Squeezed(), T, C), lambda b: (b, 0, 0)),
                # Weights/biases: constant index_maps -> fetched once, resident.
                pl.BlockSpec((C, 3 * C), lambda b: (0, 0)),
                pl.BlockSpec((1, 3 * C), lambda b: (0, 0)),
                pl.BlockSpec((C, C), lambda b: (0, 0)),
                pl.BlockSpec((1, C), lambda b: (0, 0)),
            ],
            out_specs=pl.BlockSpec((pl.Squeezed(), T, C), lambda b: (b, 0, 0)),
        ),
        compiler_params=pltpu.CompilerParams(
            # Batch axis is parallel (megacore on v7x); no reduction axes left.
            dimension_semantics=("parallel",),
            # Safe scoped-VMEM budget on v5e/v6e (128 MiB) and v7x (64 MiB).
            vmem_limit_bytes=32 * 1024 * 1024,
        ),
    )(x_c, wqkv, bqkv, wproj_t, bproj)


def _reference(x, w_attn, b_attn, w_proj, b_proj, n_head):
    """Pure-JAX reference mirroring the PyTorch forward, for verification."""
    B, T, C = x.shape
    hd = C // n_head
    qkv = x @ w_attn.T + b_attn                    # (B, T, 3C)
    q, k, v = jnp.split(qkv, 3, axis=2)
    q = q.reshape(B, T, n_head, hd).transpose(0, 2, 1, 3)
    k = k.reshape(B, T, n_head, hd).transpose(0, 2, 1, 3)
    v = v.reshape(B, T, n_head, hd).transpose(0, 2, 1, 3)
    attn = (q @ jnp.swapaxes(k, -2, -1)) * (1.0 / math.sqrt(hd))
    attn = jax.nn.softmax(attn, axis=-1)
    y = attn @ v                                   # (B, H, T, hd)
    y = y.transpose(0, 2, 1, 3).reshape(B, T, C)
    return y @ w_proj.T + b_proj


if __name__ == "__main__":
    # config: n_embd=32, n_head=4 ; inputs: B=2, T=8
    B, T, C, n_head = 2, 8, 32, 4

    key = jax.random.PRNGKey(0)
    kx, kw1, kb1, kw2, kb2 = jax.random.split(key, 5)

    x = jax.random.normal(kx, (B, T, C), dtype=jnp.float32)
    # nn.Linear(n_embd, 3*n_embd): weight (3C, C), bias (3C,)
    w_attn = jax.random.normal(kw1, (3 * C, C), dtype=jnp.float32) * 0.02
    b_attn = jax.random.normal(kb1, (3 * C,), dtype=jnp.float32) * 0.02
    # nn.Linear(n_embd, n_embd): weight (C, C), bias (C,)
    w_proj = jax.random.normal(kw2, (C, C), dtype=jnp.float32) * 0.02
    b_proj = jax.random.normal(kb2, (C,), dtype=jnp.float32) * 0.02

    ref = _reference(x, w_attn, b_attn, w_proj, b_proj, n_head)

    # 1) verification path: f32 MXU operands, tight check of semantics.
    out_f32 = jax.block_until_ready(
        self_attention(x, w_attn, b_attn, w_proj, b_proj, n_head=n_head,
                       compute_dtype=jnp.float32))
    assert out_f32.shape == (B, T, C)
    assert jnp.allclose(out_f32, ref, atol=1e-4, rtol=1e-3), \
        "f32 mismatch vs reference"

    # 2) performance path: bf16 MXU operands, f32 accumulation.
    out_bf16 = jax.block_until_ready(
        self_attention(x, w_attn, b_attn, w_proj, b_proj, n_head=n_head,
                       compute_dtype=jnp.bfloat16))
    assert out_bf16.dtype == x.dtype
    assert jnp.allclose(out_bf16, ref, atol=5e-3, rtol=5e-2), \
        "bf16 mismatch vs reference"

    print("KERNEL_OK")
</pallas_src>

<mosaic_0001>
module attributes {stable_mosaic.version = 11 : i64} {
  func.func @_self_attention_kernel(%arg0: i32, %arg1: memref<1x8x32xf32, #tpu.memory_space<vmem>>, %arg2: memref<32x96xf32, #tpu.memory_space<vmem>>, %arg3: memref<1x96xf32, #tpu.memory_space<vmem>>, %arg4: memref<32x32xf32, #tpu.memory_space<vmem>>, %arg5: memref<1x32xf32, #tpu.memory_space<vmem>>, %arg6: memref<1x8x32xf32, #tpu.memory_space<vmem>>) attributes {dimension_semantics = [#tpu.dimension_semantics<parallel>], iteration_bounds = array<i64: 2>, scalar_prefetch = 0 : i64, scratch_operands = 0 : i64, tpu.core_type = #tpu.core_type<tc>, window_params = [{transform_indices = @transform_0, window_bounds = array<i64: 1, 8, 32>}, {pipeline_mode = #tpu.pipeline_mode<synchronous>, transform_indices = @transform_1, window_bounds = array<i64: 32, 96>}, {pipeline_mode = #tpu.pipeline_mode<synchronous>, transform_indices = @transform_2, window_bounds = array<i64: 1, 96>}, {pipeline_mode = #tpu.pipeline_mode<synchronous>, transform_indices = @transform_3, window_bounds = array<i64: 32, 32>}, {pipeline_mode = #tpu.pipeline_mode<synchronous>, transform_indices = @transform_4, window_bounds = array<i64: 1, 32>}, {transform_indices = @transform_5, window_bounds = array<i64: 1, 8, 32>}]} {
    %c0 = arith.constant 0 : index
    %c0_0 = arith.constant 0 : index
    %c0_1 = arith.constant 0 : index
    %0 = vector.load %arg1[%c0, %c0_0, %c0_1] : memref<1x8x32xf32, #tpu.memory_space<vmem>>, vector<1x8x32xf32>
    %1 = vector.shape_cast %0 : vector<1x8x32xf32> to vector<8x32xf32>
    %c0_2 = arith.constant 0 : index
    %c0_3 = arith.constant 0 : index
    %2 = vector.load %arg2[%c0_2, %c0_3] : memref<32x96xf32, #tpu.memory_space<vmem>>, vector<32x96xf32>
    %cst = arith.constant dense<0.000000e+00> : vector<8x96xf32>
    %3 = tpu.matmul %1, %2, %cst {dimension_numbers = #tpu.dot_dimension_numbers<[1], [0], [0], [1], [0, 0, 1, 1], [], []>} : vector<8x32xf32>, vector<32x96xf32>, vector<8x96xf32> -> vector<8x96xf32>
    %c0_4 = arith.constant 0 : index
    %c0_5 = arith.constant 0 : index
    %4 = vector.load %arg3[%c0_4, %c0_5] : memref<1x96xf32, #tpu.memory_space<vmem>>, vector<1x96xf32>
    %5 = vector.broadcast %4 : vector<1x96xf32> to vector<8x96xf32>
    %6 = arith.addf %3, %5 : vector<8x96xf32>
    %7 = vector.extract_strided_slice %6 {offsets = [0, 0], sizes = [8, 32], strides = [1, 1]} : vector<8x96xf32> to vector<8x32xf32>
    %8 = vector.extract_strided_slice %6 {offsets = [0, 32], sizes = [8, 32], strides = [1, 1]} : vector<8x96xf32> to vector<8x32xf32>
    %9 = vector.extract_strided_slice %6 {offsets = [0, 64], sizes = [8, 32], strides = [1, 1]} : vector<8x96xf32> to vector<8x32xf32>
    %c0_6 = arith.constant 0 : index
    %c0_7 = arith.constant 0 : index
    %10 = vector.load %arg4[%c0_6, %c0_7] : memref<32x32xf32, #tpu.memory_space<vmem>>, vector<32x32xf32>
    %c0_8 = arith.constant 0 : index
    %c0_9 = arith.constant 0 : index
    %11 = vector.load %arg5[%c0_8, %c0_9] : memref<1x32xf32, #tpu.memory_space<vmem>>, vector<1x32xf32>
    %12 = vector.shape_cast %11 : vector<1x32xf32> to vector<1x32xf32>
    %13 = vector.broadcast %12 : vector<1x32xf32> to vector<8x32xf32>
    %14 = vector.extract_strided_slice %7 {offsets = [0, 0], sizes = [8, 8], strides = [1, 1]} : vector<8x32xf32> to vector<8x8xf32>
    %15 = vector.extract_strided_slice %8 {offsets = [0, 0], sizes = [8, 8], strides = [1, 1]} : vector<8x32xf32> to vector<8x8xf32>
    %16 = vector.extract_strided_slice %9 {offsets = [0, 0], sizes = [8, 8], strides = [1, 1]} : vector<8x32xf32> to vector<8x8xf32>
    %cst_10 = arith.constant dense<0.000000e+00> : vector<8x8xf32>
    %17 = tpu.matmul %14, %15, %cst_10 {dimension_numbers = #tpu.dot_dimension_numbers<[1], [1], [0], [0], [0, 0, 1, 0], [], []>} : vector<8x8xf32>, vector<8x8xf32>, vector<8x8xf32> -> vector<8x8xf32>
    %cst_11 = arith.constant dense<0xFF800000> : vector<8xf32>
    %18 = vector.multi_reduction <maximumf>, %17, %cst_11 [1] : vector<8x8xf32> to vector<8xf32>
    %19 = vector.shape_cast %18 : vector<8xf32> to vector<8x1xf32>
    %20 = vector.broadcast %19 : vector<8x1xf32> to vector<8x8xf32>
    %21 = arith.subf %17, %20 : vector<8x8xf32>
    %22 = math.exp %21 : vector<8x8xf32>
    %cst_12 = arith.constant dense<0.000000e+00> : vector<8xf32>
    %23 = vector.multi_reduction <add>, %22, %cst_12 [1] : vector<8x8xf32> to vector<8xf32>
    %24 = vector.shape_cast %23 : vector<8xf32> to vector<8x1xf32>
    %cst_13 = arith.constant dense<0.000000e+00> : vector<8x8xf32>
    %25 = tpu.matmul %22, %16, %cst_13 {dimension_numbers = #tpu.dot_dimension_numbers<[1], [0], [0], [1], [0, 0, 1, 1], [], []>} : vector<8x8xf32>, vector<8x8xf32>, vector<8x8xf32> -> vector<8x8xf32>
    %26 = tpu.reciprocal %24 : vector<8x1xf32> -> vector<8x1xf32>
    %27 = vector.broadcast %26 : vector<8x1xf32> to vector<8x8xf32>
    %28 = arith.mulf %25, %27 : vector<8x8xf32>
    %29 = vector.extract_strided_slice %10 {offsets = [0, 0], sizes = [8, 32], strides = [1, 1]} : vector<32x32xf32> to vector<8x32xf32>
    %cst_14 = arith.constant dense<0.000000e+00> : vector<8x32xf32>
    %30 = tpu.matmul %28, %29, %cst_14 {dimension_numbers = #tpu.dot_dimension_numbers<[1], [0], [0], [1], [0, 0, 1, 1], [], []>} : vector<8x8xf32>, vector<8x32xf32>, vector<8x32xf32> -> vector<8x32xf32>
    %31 = arith.addf %13, %30 : vector<8x32xf32>
    %32 = vector.extract_strided_slice %7 {offsets = [0, 8], sizes = [8, 8], strides = [1, 1]} : vector<8x32xf32> to vector<8x8xf32>
    %33 = vector.extract_strided_slice %8 {offsets = [0, 8], sizes = [8, 8], strides = [1, 1]} : vector<8x32xf32> to vector<8x8xf32>
    %34 = vector.extract_strided_slice %9 {offsets = [0, 8], sizes = [8, 8], strides = [1, 1]} : vector<8x32xf32> to vector<8x8xf32>
    %cst_15 = arith.constant dense<0.000000e+00> : vector<8x8xf32>
    %35 = tpu.matmul %32, %33, %cst_15 {dimension_numbers = #tpu.dot_dimension_numbers<[1], [1], [0], [0], [0, 0, 1, 0], [], []>} : vector<8x8xf32>, vector<8x8xf32>, vector<8x8xf32> -> vector<8x8xf32>
    %cst_16 = arith.constant dense<0xFF800000> : vector<8xf32>
    %36 = vector.multi_reduction <maximumf>, %35, %cst_16 [1] : vector<8x8xf32> to vector<8xf32>
    %37 = vector.shape_cast %36 : vector<8xf32> to vector<8x1xf32>
    %38 = vector.broadcast %37 : vector<8x1xf32> to vector<8x8xf32>
    %39 = arith.subf %35, %38 : vector<8x8xf32>
    %40 = math.exp %39 : vector<8x8xf32>
    %cst_17 = arith.constant dense<0.000000e+00> : vector<8xf32>
    %41 = vector.multi_reduction <add>, %40, %cst_17 [1] : vector<8x8xf32> to vector<8xf32>
    %42 = vector.shape_cast %41 : vector<8xf32> to vector<8x1xf32>
    %cst_18 = arith.constant dense<0.000000e+00> : vector<8x8xf32>
    %43 = tpu.matmul %40, %34, %cst_18 {dimension_numbers = #tpu.dot_dimension_numbers<[1], [0], [0], [1], [0, 0, 1, 1], [], []>} : vector<8x8xf32>, vector<8x8xf32>, vector<8x8xf32> -> vector<8x8xf32>
    %44 = tpu.reciprocal %42 : vector<8x1xf32> -> vector<8x1xf32>
    %45 = vector.broadcast %44 : vector<8x1xf32> to vector<8x8xf32>
    %46 = arith.mulf %43, %45 : vector<8x8xf32>
    %47 = vector.extract_strided_slice %10 {offsets = [8, 0], sizes = [8, 32], strides = [1, 1]} : vector<32x32xf32> to vector<8x32xf32>
    %cst_19 = arith.constant dense<0.000000e+00> : vector<8x32xf32>
    %48 = tpu.matmul %46, %47, %cst_19 {dimension_numbers = #tpu.dot_dimension_numbers<[1], [0], [0], [1], [0, 0, 1, 1], [], []>} : vector<8x8xf32>, vector<8x32xf32>, vector<8x32xf32> -> vector<8x32xf32>
    %49 = arith.addf %31, %48 : vector<8x32xf32>
    %50 = vector.extract_strided_slice %7 {offsets = [0, 16], sizes = [8, 8], strides = [1, 1]} : vector<8x32xf32> to vector<8x8xf32>
    %51 = vector.extract_strided_slice %8 {offsets = [0, 16], sizes = [8, 8], strides = [1, 1]} : vector<8x32xf32> to vector<8x8xf32>
    %52 = vector.extract_strided_slice %9 {offsets = [0, 16], sizes = [8, 8], strides = [1, 1]} : vector<8x32xf32> to vector<8x8xf32>
    %cst_20 = arith.constant dense<0.000000e+00> : vector<8x8xf32>
    %53 = tpu.matmul %50, %51, %cst_20 {dimension_numbers = #tpu.dot_dimension_numbers<[1], [1], [0], [0], [0, 0, 1, 0], [], []>} : vector<8x8xf32>, vector<8x8xf32>, vector<8x8xf32> -> vector<8x8xf32>
    %cst_21 = arith.constant dense<0xFF800000> : vector<8xf32>
    %54 = vector.multi_reduction <maximumf>, %53, %cst_21 [1] : vector<8x8xf32> to vector<8xf32>
    %55 = vector.shape_cast %54 : vector<8xf32> to vector<8x1xf32>
    %56 = vector.broadcast %55 : vector<8x1xf32> to vector<8x8xf32>
    %57 = arith.subf %53, %56 : vector<8x8xf32>
    %58 = math.exp %57 : vector<8x8xf32>
    %cst_22 = arith.constant dense<0.000000e+00> : vector<8xf32>
    %59 = vector.multi_reduction <add>, %58, %cst_22 [1] : vector<8x8xf32> to vector<8xf32>
    %60 = vector.shape_cast %59 : vector<8xf32> to vector<8x1xf32>
    %cst_23 = arith.constant dense<0.000000e+00> : vector<8x8xf32>
    %61 = tpu.matmul %58, %52, %cst_23 {dimension_numbers = #tpu.dot_dimension_numbers<[1], [0], [0], [1], [0, 0, 1, 1], [], []>} : vector<8x8xf32>, vector<8x8xf32>, vector<8x8xf32> -> vector<8x8xf32>
    %62 = tpu.reciprocal %60 : vector<8x1xf32> -> vector<8x1xf32>
    %63 = vector.broadcast %62 : vector<8x1xf32> to vector<8x8xf32>
    %64 = arith.mulf %61, %63 : vector<8x8xf32>
    %65 = vector.extract_strided_slice %10 {offsets = [16, 0], sizes = [8, 32], strides = [1, 1]} : vector<32x32xf32> to vector<8x32xf32>
    %cst_24 = arith.constant dense<0.000000e+00> : vector<8x32xf32>
    %66 = tpu.matmul %64, %65, %cst_24 {dimension_numbers = #tpu.dot_dimension_numbers<[1], [0], [0], [1], [0, 0, 1, 1], [], []>} : vector<8x8xf32>, vector<8x32xf32>, vector<8x32xf32> -> vector<8x32xf32>
    %67 = arith.addf %49, %66 : vector<8x32xf32>
    %68 = vector.extract_strided_slice %7 {offsets = [0, 24], sizes = [8, 8], strides = [1, 1]} : vector<8x32xf32> to vector<8x8xf32>
    %69 = vector.extract_strided_slice %8 {offsets = [0, 24], sizes = [8, 8], strides = [1, 1]} : vector<8x32xf32> to vector<8x8xf32>
    %70 = vector.extract_strided_slice %9 {offsets = [0, 24], sizes = [8, 8], strides = [1, 1]} : vector<8x32xf32> to vector<8x8xf32>
    %cst_25 = arith.constant dense<0.000000e+00> : vector<8x8xf32>
    %71 = tpu.matmul %68, %69, %cst_25 {dimension_numbers = #tpu.dot_dimension_numbers<[1], [1], [0], [0], [0, 0, 1, 0], [], []>} : vector<8x8xf32>, vector<8x8xf32>, vector<8x8xf32> -> vector<8x8xf32>
    %cst_26 = arith.constant dense<0xFF800000> : vector<8xf32>
    %72 = vector.multi_reduction <maximumf>, %71, %cst_26 [1] : vector<8x8xf32> to vector<8xf32>
    %73 = vector.shape_cast %72 : vector<8xf32> to vector<8x1xf32>
    %74 = vector.broadcast %73 : vector<8x1xf32> to vector<8x8xf32>
    %75 = arith.subf %71, %74 : vector<8x8xf32>
    %76 = math.exp %75 : vector<8x8xf32>
    %cst_27 = arith.constant dense<0.000000e+00> : vector<8xf32>
    %77 = vector.multi_reduction <add>, %76, %cst_27 [1] : vector<8x8xf32> to vector<8xf32>
    %78 = vector.shape_cast %77 : vector<8xf32> to vector<8x1xf32>
    %cst_28 = arith.constant dense<0.000000e+00> : vector<8x8xf32>
    %79 = tpu.matmul %76, %70, %cst_28 {dimension_numbers = #tpu.dot_dimension_numbers<[1], [0], [0], [1], [0, 0, 1, 1], [], []>} : vector<8x8xf32>, vector<8x8xf32>, vector<8x8xf32> -> vector<8x8xf32>
    %80 = tpu.reciprocal %78 : vector<8x1xf32> -> vector<8x1xf32>
    %81 = vector.broadcast %80 : vector<8x1xf32> to vector<8x8xf32>
    %82 = arith.mulf %79, %81 : vector<8x8xf32>
    %83 = vector.extract_strided_slice %10 {offsets = [24, 0], sizes = [8, 32], strides = [1, 1]} : vector<32x32xf32> to vector<8x32xf32>
    %cst_29 = arith.constant dense<0.000000e+00> : vector<8x32xf32>
    %84 = tpu.matmul %82, %83, %cst_29 {dimension_numbers = #tpu.dot_dimension_numbers<[1], [0], [0], [1], [0, 0, 1, 1], [], []>} : vector<8x8xf32>, vector<8x32xf32>, vector<8x32xf32> -> vector<8x32xf32>
    %85 = arith.addf %67, %84 : vector<8x32xf32>
    %c0_30 = arith.constant 0 : index
    %c0_31 = arith.constant 0 : index
    %c0_32 = arith.constant 0 : index
    %86 = vector.load %arg6[%c0_30, %c0_31, %c0_32] : memref<1x8x32xf32, #tpu.memory_space<vmem>>, vector<1x8x32xf32>
    %87 = vector.shape_cast %86 : vector<1x8x32xf32> to vector<8x32xf32>
    %88 = vector.shape_cast %85 : vector<8x32xf32> to vector<1x8x32xf32>
    tpu.vector_store %arg6[%c0_30, %c0_31, %c0_32], %88 {strides = array<i32>} : memref<1x8x32xf32, #tpu.memory_space<vmem>>, vector<1x8x32xf32>,
    return
  }
  func.func @transform_0(%arg0: i32) -> (i32, i32, i32) {
    %c0_i32 = arith.constant 0 : i32
    %c0_i32_0 = arith.constant 0 : i32
    %c0_i32_1 = arith.constant 0 : i32
    return %arg0, %c0_i32, %c0_i32_0 : i32, i32, i32
  }
  func.func @transform_1(%arg0: i32) -> (i32, i32) {
    %c0_i32 = arith.constant 0 : i32
    %c0_i32_0 = arith.constant 0 : i32
    %c0_i32_1 = arith.constant 0 : i32
    return %c0_i32, %c0_i32_0 : i32, i32
  }
  func.func @transform_2(%arg0: i32) -> (i32, i32) {
    %c0_i32 = arith.constant 0 : i32
    %c0_i32_0 = arith.constant 0 : i32
    %c0_i32_1 = arith.constant 0 : i32
    return %c0_i32, %c0_i32_0 : i32, i32
  }
  func.func @transform_3(%arg0: i32) -> (i32, i32) {
    %c0_i32 = arith.constant 0 : i32
    %c0_i32_0 = arith.constant 0 : i32
    %c0_i32_1 = arith.constant 0 : i32
    return %c0_i32, %c0_i32_0 : i32, i32
  }
  func.func @transform_4(%arg0: i32) -> (i32, i32) {
    %c0_i32 = arith.constant 0 : i32
    %c0_i32_0 = arith.constant 0 : i32
    %c0_i32_1 = arith.constant 0 : i32
    return %c0_i32, %c0_i32_0 : i32, i32
  }
  func.func @transform_5(%arg0: i32) -> (i32, i32, i32) {
    %c0_i32 = arith.constant 0 : i32
    %c0_i32_0 = arith.constant 0 : i32
    %c0_i32_1 = arith.constant 0 : i32
    return %arg0, %c0_i32, %c0_i32_0 : i32, i32, i32
  }
}

</mosaic_0001>

<llo_original>
// kernel: tpu_custom_call.1
$region0: #{tpu_custom_call.1}
  #allocation0 [shape = 'u32[]', space=smem, size = 0x4, offset = 0x4, fixed_abs, tag = 'smem constant byte address 0x4 - core index']
  #allocation1 [shape = 'u32[144,128]{1,0:T(1,128)}', space=vmem, size = 0x12000, scoped, tag = 'internal scratch']
  %s0 = inlined_call_operand.hbm [shape: f32[2,8,32], index: 0, kind: input, shape index: {}]
  %s1 = inlined_call_operand.hbm [shape: f32[32,96], index: 1, kind: input, shape index: {}]
  %s2 = inlined_call_operand.vmem [shape: f32[1,96], index: 2, kind: input, shape index: {}]
  %s3 = inlined_call_operand.hbm [shape: f32[32,32], index: 3, kind: input, shape index: {}]
  %s4 = inlined_call_operand.vmem [shape: f32[1,32], index: 4, kind: input, shape index: {}]
  %s5 = inlined_call_operand.hbm [shape: f32[2,8,32], index: 5, kind: output, shape index: {}]
  %s6 = sld [smem:[#allocation0]]
  $region65: #{tpu_custom_call.1} parent=0
    _
  %s8 = ssub.s32 1, %s6
  %s9 = scalar_select 0, %s8, %s6
  $region1: #{tpu_custom_call.1} parent=0
    #allocation2 [shape = 'u8[8192]{0}', space=vmem, size = 0x2000, scoped, tag = 'input window, operand 0']
    #allocation3 [shape = 's32[2]{0}', space=sflag, size = 0x8, scoped, tag = 'scoped memory for tpu_custom_call.1']
    #allocation4 [shape = 's32[2]{0}', space=sflag, size = 0x8, scoped, tag = 'scoped memory for tpu_custom_call.1']
    #allocation5 [shape = 'u8[16384]{0}', space=vmem, size = 0x4000, scoped, tag = 'input window, operand 1, single buffered']
    #allocation6 [shape = 's32[1]{0}', space=sflag, size = 0x4, scoped, tag = 'scoped memory for tpu_custom_call.1']
    #allocation7 [shape = 'u8[16384]{0}', space=vmem, size = 0x4000, scoped, tag = 'input window, operand 3, single buffered']
    #allocation8 [shape = 'u8[8192]{0}', space=vmem, size = 0x2000, scoped, tag = 'output window, operand 0']
    %10 = vsyncpa [#allocation3], 0
    %s11 = scalar_lea.sflag [#allocation3], 1
    %12 = vsyncpa %s11, 0
    %13 = vsyncpa [#allocation6], 0
    %14 = vsyncpa [#allocation4], 0
    %s15 = scalar_lea.sflag [#allocation4], 1
    %16 = vsyncpa %s15, 0
    loop: start=0, step=1, limit=4
    $region2: #{tpu_custom_call.1} parent=1 // loop_pre_header
      _
    $region3: #{tpu_custom_call.1} parent=1 // loop_header
      %s18 = sphi 0, %s22
      %p19 = scmp.ge.s32.totalorder %s18, 4
      %s28 = sphi 0, %s30
      %s31 = sphi 0, %s28
      %s32 = sphi 0, %s31
      %s48 = sphi 0, %s32
      %s52 = sphi 0, %s52
      %s54 = sphi 0, %s52
      %s55 = sphi 0, %s54
      %s69 = sphi 0, %s55
      %s73 = sphi 0, %s73
      %s75 = sphi 0, %s73
      %s76 = sphi 0, %s75
      %s90 = sphi 0, %s76
      %s94 = sphi 0, %s94
      %s96 = sphi 0, %s94
      %s97 = sphi 0, %s96
      %s111 = sphi 0, %s97
      %s115 = sphi 0, %s115
      %s117 = sphi 0, %s115
      %s118 = sphi 0, %s117
      %s132 = sphi 0, %s118
      %s138 = sphi 0, %s140
      %s141 = sphi 0, %s138
      %s142 = sphi 0, %s141
      %s158 = sphi 0, %s142
    $region4: #{tpu_custom_call.1} parent=1 // loop_header_branch
      %21 = sbr.rel (%p19) target = $region8
    $region5: #{tpu_custom_call.1} parent=1 // loop_body
      %s23 = ssub.s32 %s18, 1
      %s24 = ssub.s32 %s18, 2
      %s25 = sadd.s32 %s18, 1
      %s26 = ssub.s32 %s18, %s25
      %p27 = scmp.eq.s32.totalorder %s26, 0
      %s29 = sadd.s32 %s28, 1
      %s30 = scalar_select %p27, %s28, %s29
      %p33 = pneg %p27
      %p34 = scmp.eq.s32.totalorder %s18, 1
      %p35 = por %p33, %p34
      %p36 = scmp.ne.s32.totalorder %s28, %s31
      %p37 = scmp.eq.s32.totalorder %s18, 0
      %p38 = por %p36, %p37
      %p39 = scmp.ne.s32.totalorder %s28, %s31
      %p40 = scmp.eq.s32.totalorder %s23, 1
      %p41 = por %p39, %p40
      %p42 = scmp.ne.s32.totalorder %s31, %s32
      %p43 = scmp.eq.s32.totalorder %s23, 0
      %p44 = por %p42, %p43
      %p45 = scmp.ne.s32.totalorder %s31, %s32
      %p46 = scmp.eq.s32.totalorder %s24, 1
      %p47 = por %p45, %p46
      %p49 = scmp.ne.s32.totalorder %s32, %s48
      %p50 = scmp.eq.s32.totalorder %s24, 0
      %p51 = por %p49, %p50
      %s53 = sadd.s32 %s52, 1
      %p56 = scmp.eq.s32.totalorder %s18, 1
      %p57 = scmp.ne.s32.totalorder %s52, %s54
      %p58 = scmp.eq.s32.totalorder %s18, 0
      %p59 = por %p57, %p58
      %p60 = scmp.ne.s32.totalorder %s52, %s54
      %p61 = scmp.eq.s32.totalorder %s23, 1
      %p62 = por %p60, %p61
      %p63 = scmp.ne.s32.totalorder %s54, %s55
      %p64 = scmp.eq.s32.totalorder %s23, 0
      %p65 = por %p63, %p64
      %p66 = scmp.ne.s32.totalorder %s54, %s55
      %p67 = scmp.eq.s32.totalorder %s24, 1
      %p68 = por %p66, %p67
      %p70 = scmp.ne.s32.totalorder %s55, %s69
      %p71 = scmp.eq.s32.totalorder %s24, 0
      %p72 = por %p70, %p71
      %s74 = sadd.s32 %s73, 1
      %p77 = scmp.eq.s32.totalorder %s18, 1
      %p78 = scmp.ne.s32.totalorder %s73, %s75
      %p79 = scmp.eq.s32.totalorder %s18, 0
      %p80 = por %p78, %p79
      %p81 = scmp.ne.s32.totalorder %s73, %s75
      %p82 = scmp.eq.s32.totalorder %s23, 1
      %p83 = por %p81, %p82
      %p84 = scmp.ne.s32.totalorder %s75, %s76
      %p85 = scmp.eq.s32.totalorder %s23, 0
      %p86 = por %p84, %p85
      %p87 = scmp.ne.s32.totalorder %s75, %s76
      %p88 = scmp.eq.s32.totalorder %s24, 1
      %p89 = por %p87, %p88
      %p91 = scmp.ne.s32.totalorder %s76, %s90
      %p92 = scmp.eq.s32.totalorder %s24, 0
      %p93 = por %p91, %p92
      %s95 = sadd.s32 %s94, 1
      %p98 = scmp.eq.s32.totalorder %s18, 1
      %p99 = scmp.ne.s32.totalorder %s94, %s96
      %p100 = scmp.eq.s32.totalorder %s18, 0
      %p101 = por %p99, %p100
      %p102 = scmp.ne.s32.totalorder %s94, %s96
      %p103 = scmp.eq.s32.totalorder %s23, 1
      %p104 = por %p102, %p103
      %p105 = scmp.ne.s32.totalorder %s96, %s97
      %p106 = scmp.eq.s32.totalorder %s23, 0
      %p107 = por %p105, %p106
      %p108 = scmp.ne.s32.totalorder %s96, %s97
      %p109 = scmp.eq.s32.totalorder %s24, 1
      %p110 = por %p108, %p109
      %p112 = scmp.ne.s32.totalorder %s97, %s111
      %p113 = scmp.eq.s32.totalorder %s24, 0
      %p114 = por %p112, %p113
      %s116 = sadd.s32 %s115, 1
      %p119 = scmp.eq.s32.totalorder %s18, 1
      %p120 = scmp.ne.s32.totalorder %s115, %s117
      %p121 = scmp.eq.s32.totalorder %s18, 0
      %p122 = por %p120, %p121
      %p123 = scmp.ne.s32.totalorder %s115, %s117
      %p124 = scmp.eq.s32.totalorder %s23, 1
      %p125 = por %p123, %p124
      %p126 = scmp.ne.s32.totalorder %s117, %s118
      %p127 = scmp.eq.s32.totalorder %s23, 0
      %p128 = por %p126, %p127
      %p129 = scmp.ne.s32.totalorder %s117, %s118
      %p130 = scmp.eq.s32.totalorder %s24, 1
      %p131 = por %p129, %p130
      %p133 = scmp.ne.s32.totalorder %s118, %s132
      %p134 = scmp.eq.s32.totalorder %s24, 0
      %p135 = por %p133, %p134
      %s136 = ssub.s32 %s18, %s25
      %p137 = scmp.eq.s32.totalorder %s136, 0
      %s139 = sadd.s32 %s138, 1
      %s140 = scalar_select %p137, %s138, %s139
      %p143 = pneg %p137
      %p144 = scmp.eq.s32.totalorder %s18, 1
      %p145 = por %p143, %p144
      %p146 = scmp.ne.s32.totalorder %s138, %s141
      %p147 = scmp.eq.s32.totalorder %s18, 0
      %p148 = por %p146, %p147
      %p149 = scmp.ne.s32.totalorder %s138, %s141
      %p150 = scmp.eq.s32.totalorder %s23, 1
      %p151 = por %p149, %p150
      %p152 = scmp.ne.s32.totalorder %s141, %s142
      %p153 = scmp.eq.s32.totalorder %s23, 0
      %p154 = por %p152, %p153
      %p155 = scmp.ne.s32.totalorder %s141, %s142
      %p156 = scmp.eq.s32.totalorder %s24, 1
      %p157 = por %p155, %p156
      %p159 = scmp.ne.s32.totalorder %s142, %s158
      %p160 = scmp.eq.s32.totalorder %s24, 0
      %p161 = por %p159, %p160
      %p162 = scmp.le.s32.totalorder 1, %s18
      %p163 = scmp.lt.s32.totalorder %s18, 3
      %p164 = pnand %p162, %p163
      %p165 = pneg %p164
      // Predicated region
      $region9: #{tpu_custom_call.1} parent=5 // pred_check
        _
      $region10: #{tpu_custom_call.1} parent=5 // pred_check_branch
        %167 = sbr.rel (%p164) target = $region12
      $region11: #{tpu_custom_call.1} parent=5 // pred_region
        %s168 = ssub.s32 %s18, 1
        // Predicated region
        $region13: #{tpu_custom_call.1} parent=11 // pred_check
          %p169 = pneg %p65
        $region14: #{tpu_custom_call.1} parent=11 // pred_check_branch
          %171 = sbr.rel (%p169) target = $region16
        $region15: #{tpu_custom_call.1} parent=11 // pred_region
          %s173 = ssub.s32 512, 512
          %174 = vsyncadd [#allocation6], %s173
          %s175 = sshll.u32 [#allocation5], 4
          %s176 = int_to_ptr.vmem [resolvable:$true] %s175
          %181 = dma.hbm_to_vmem [thread:$0]  %s1, 512, %s176, [#allocation6], 128, 128, 8
        $region16: #{tpu_custom_call.1} parent=11 // pred_fallthru
          _
        // Predicated region
        $region17: #{tpu_custom_call.1} parent=11 // pred_check
          %p182 = pneg %p86
        $region18: #{tpu_custom_call.1} parent=11 // pred_check_branch
          %184 = sbr.rel (%p182) target = $region20
        $region19: #{tpu_custom_call.1} parent=11 // pred_region
          _
        $region20: #{tpu_custom_call.1} parent=11 // pred_fallthru
          _
        // Predicated region
        $region21: #{tpu_custom_call.1} parent=11 // pred_check
          %p185 = pneg %p107
        $region22: #{tpu_custom_call.1} parent=11 // pred_check_branch
          %187 = sbr.rel (%p185) target = $region24
        $region23: #{tpu_custom_call.1} parent=11 // pred_region
          %s189 = ssub.s32 512, 512
          %190 = vsyncadd [#allocation6], %s189
          %s191 = sshll.u32 [#allocation7], 4
          %s192 = int_to_ptr.vmem [resolvable:$true] %s191
          %197 = dma.hbm_to_vmem [thread:$0]  %s3, 512, %s192, [#allocation6], 128, 128, 8
        $region24: #{tpu_custom_call.1} parent=11 // pred_fallthru
          _
        // Predicated region
        $region25: #{tpu_custom_call.1} parent=11 // pred_check
          %p198 = pneg %p128
        $region26: #{tpu_custom_call.1} parent=11 // pred_check_branch
          %200 = sbr.rel (%p198) target = $region28
        $region27: #{tpu_custom_call.1} parent=11 // pred_region
          _
        $region28: #{tpu_custom_call.1} parent=11 // pred_fallthru
          _
      $region12: #{tpu_custom_call.1} parent=5 // pred_fallthru
        _
      %p201 = scmp.lt.s32.totalorder %s18, 2
      // Predicated region
      $region29: #{tpu_custom_call.1} parent=5 // pred_check
        %p202 = pneg %p201
      $region30: #{tpu_custom_call.1} parent=5 // pred_check_branch
        %204 = sbr.rel (%p202) target = $region32
      $region31: #{tpu_custom_call.1} parent=5 // pred_region
        // Predicated region
        $region33: #{tpu_custom_call.1} parent=31 // pred_check
          %p205 = pneg %p38
        $region34: #{tpu_custom_call.1} parent=31 // pred_check_branch
          %207 = sbr.rel (%p205) target = $region36
        $region35: #{tpu_custom_call.1} parent=31 // pred_region
          %s208 = sand.u32 %s28, 1
          %s209 = scalar_lea.sflag [#allocation3], %s208
          %s210 = sand.u32 %s28, 1
          %s211 = smul.addr %s210, 8
          %s212 = scalar_lea.vmem [#allocation2], %s211
          %s214 = ssub.s32 128, 128
          %215 = vsyncadd %s209, %s214
          %s216 = smul.addr %s18, 128
          %s217 = scalar_lea.hbm %s0, %s216
          %s219 = sshll.u32 %s212, 4
          %s220 = int_to_ptr.vmem [resolvable:$true] %s219
          %222 = dma.hbm_to_vmem [thread:$0]  %s217, 128, %s220, %s209
        $region36: #{tpu_custom_call.1} parent=31 // pred_fallthru
          _
      $region32: #{tpu_custom_call.1} parent=5 // pred_fallthru
        _
      %p223 = scmp.le.s32.totalorder 1, %s18
      %p224 = scmp.lt.s32.totalorder %s18, 3
      %p225 = pnand %p223, %p224
      %p226 = pneg %p225
      // Predicated region
      $region37: #{tpu_custom_call.1} parent=5 // pred_check
        _
      $region38: #{tpu_custom_call.1} parent=5 // pred_check_branch
        %228 = sbr.rel (%p225) target = $region40
      $region39: #{tpu_custom_call.1} parent=5 // pred_region
        %s229 = ssub.s32 %s18, 1
        %s230 = sand.u32 %s31, 1
        %s231 = scalar_lea.sflag [#allocation3], %s230
        %s232 = sand.u32 %s31, 1
        %s233 = smul.addr %s232, 8
        %s234 = scalar_lea.vmem [#allocation2], %s233
        // Predicated region
        $region41: #{tpu_custom_call.1} parent=39 // pred_check
          %p235 = pneg %p44
        $region42: #{tpu_custom_call.1} parent=39 // pred_check_branch
          %237 = sbr.rel (%p235) target = $region44
        $region43: #{tpu_custom_call.1} parent=39 // pred_region
          %238 = dma.done %s231, 128
        $region44: #{tpu_custom_call.1} parent=39 // pred_fallthru
          _
        // Predicated region
        $region45: #{tpu_custom_call.1} parent=39 // pred_check
          %p239 = pneg %p65
        $region46: #{tpu_custom_call.1} parent=39 // pred_check_branch
          %241 = sbr.rel (%p239) target = $region48
        $region47: #{tpu_custom_call.1} parent=39 // pred_region
          %242 = dma.done [#allocation6], 512
        $region48: #{tpu_custom_call.1} parent=39 // pred_fallthru
          _
        // Predicated region
        $region49: #{tpu_custom_call.1} parent=39 // pred_check
          %p243 = pneg %p107
        $region50: #{tpu_custom_call.1} parent=39 // pred_check_branch
          %245 = sbr.rel (%p243) target = $region52
        $region51: #{tpu_custom_call.1} parent=39 // pred_region
          %246 = dma.done [#allocation6], 512
        $region52: #{tpu_custom_call.1} parent=39 // pred_fallthru
          _
        %s247 = sand.u32 %s31, 1
        %s248 = scalar_lea.sflag [#allocation3], %s247
        %s249 = sand.u32 %s31, 1
        %s250 = smul.addr %s249, 8
        %s251 = scalar_lea.vmem [#allocation2], %s250
        %p252 = pneg %p44
        %p253 = pneg %p41
        %p254 = pneg %p65
        %p255 = pneg %p62
        %p256 = pneg %p86
        %p257 = pneg %p83
        %p258 = pneg %p107
        %p259 = pneg %p104
        %p260 = pneg %p128
        %p261 = pneg %p125
        %p262 = pneg %p154
        %p263 = pneg %p151
        %s264 = sand.u32 %s141, 1
        %s265 = scalar_lea.sflag [#allocation4], %s264
        %s266 = sand.u32 %s141, 1
        %s267 = smul.addr %s266, 8
        %s268 = scalar_lea.vmem [#allocation8], %s267
        %v269 = vld [vmem:[%s234] sm:$0xff]
        %v270 = vld [vmem:[#allocation5] sm:$0xff]
        %v271 = vld [vmem:[#allocation5 + $0x8] sm:$0xff]
        %v272 = vld [vmem:[#allocation5 + $0x10] sm:$0xff]
        %v273 = vld [vmem:[#allocation5 + $0x18] sm:$0xff]
        %v274 = vld [vmem:[%s2] sm:$0x1]
        %v276 = vlaneseq
        %v277 = vshrl.u32 %v276, 7
        %v278 = vsub.s32 0, %v277
        %v279 = vrot.slane %v274, %v278
        %vm281 = vcmask 261120
        %v283 = vsel %vm281, %v269, 0
        %285 = vmatprep.subr.mxu0 0.0
        %286 = vmatpush1.msra.mxu0 0.0
        %287 = vmatprep.subr.mxu0 0.0
        %288 = vmatpush1.msra.mxu0 0.0
        %289 = vmatprep.subr.mxu0 0.0
        %290 = vmatpush1.msra.mxu0 0.0
        %291 = vmatprep.subr.mxu0 0.0
        %292 = vmatpush1.msra.mxu0 0.0
        %293 = vmatprep.subr.mxu0 0.0
        %294 = vmatpush1.msra.mxu0 0.0
        %295 = vmatprep.subr.mxu0 0.0
        %296 = vmatpush1.msra.mxu0 0.0
        %297 = vmatprep.subr.mxu0 0.0
        %298 = vmatpush1.msra.mxu0 0.0
        %299 = vmatprep.subr.mxu0 0.0
        %300 = vmatpush1.msra.mxu0 0.0
        %301 = vmatprep.subr.mxu0 0.0
        %302 = vmatpush1.msra.mxu0 0.0
        %303 = vmatprep.subr.mxu0 0.0
        %304 = vmatpush1.msra.mxu0 0.0
        %305 = vmatprep.subr.mxu0 0.0
        %306 = vmatpush1.msra.mxu0 0.0
        %307 = vmatprep.subr.mxu0 0.0
        %308 = vmatpush1.msra.mxu0 0.0
        %309 = vmatprep.subr.mxu0 0.0
        %310 = vmatpush1.msra.mxu0 %v273
        %311 = vmatprep.subr.mxu0 0.0
        %312 = vmatpush1.msra.mxu0 %v272
        %313 = vmatprep.subr.mxu0 0.0
        %314 = vmatpush1.msra.mxu0 %v271
        %315 = vmatprep.subr.mxu0 0.0
        %316 = vmatpush1.msra.mxu0 %v270
        %317 = vmatprep.subr.mxu0 0.0
        %318 = vmatpush2.msra.mxu0 0.0
        %319 = vmatprep.subr.mxu0 0.0
        %320 = vmatpush2.msra.mxu0 0.0
        %321 = vmatprep.subr.mxu0 0.0
        %322 = vmatpush2.msra.mxu0 0.0
        %323 = vmatprep.subr.mxu0 0.0
        %324 = vmatpush2.msra.mxu0 0.0
        %325 = vmatprep.subr.mxu0 0.0
        %326 = vmatpush2.msra.mxu0 0.0
        %327 = vmatprep.subr.mxu0 0.0
        %328 = vmatpush2.msra.mxu0 0.0
        %329 = vmatprep.subr.mxu0 0.0
        %330 = vmatpush2.msra.mxu0 0.0
        %331 = vmatprep.subr.mxu0 0.0
        %332 = vmatpush2.msra.mxu0 0.0
        %333 = vmatprep.subr.mxu0 0.0
        %334 = vmatpush2.msra.mxu0 0.0
        %335 = vmatprep.subr.mxu0 0.0
        %336 = vmatpush2.msra.mxu0 0.0
        %337 = vmatprep.subr.mxu0 0.0
        %338 = vmatpush2.msra.mxu0 0.0
        %339 = vmatprep.subr.mxu0 0.0
        %340 = vmatpush2.msra.mxu0 0.0
        %341 = vmatprep.subr.mxu0 0.0
        %342 = vmatpush2.msra.mxu0 0.0
        %343 = vmatprep.subr.mxu0 0.0
        %344 = vmatpush2.msra.mxu0 0.0
        %345 = vmatprep.subr.mxu0 0.0
        %346 = vmatpush2.msra.mxu0 0.0
        %347 = vmatprep.subr.mxu0 0.0
        %348 = vmatpush2.msra.mxu0 0.0
        %349 = vmatprep.mubr.f32.mxu0 0.0
        %350 = vmatmul.mubr.f32.gmra.mxu0 %v283
        %v351 = vpop.f32.mrf.mxu0
        %v352 = vadd.f32 %v279, %v351
        %v353 = vpop.f32.mrf.mxu0
        %354 = vdwg.mxu0
        %v355 = vld [vmem:[#allocation7] sm:$0xff]
        %v356 = vld [vmem:[#allocation7 + $0x8] sm:$0xff]
        %v357 = vld [vmem:[#allocation7 + $0x10] sm:$0xff]
        %v358 = vld [vmem:[#allocation7 + $0x18] sm:$0xff]
        %v359 = vld [vmem:[%s4] sm:$0x1]
        %v361 = vlaneseq
        %v362 = vshrl.u32 %v361, 7
        %v363 = vsub.s32 0, %v362
        %v364 = vrot.slane %v359, %v363
        %367 = vrot.lane.b32.xlu0 %v352, 96
        %v368 = vpop.permute.xlu0 %367
        %vm369 = vcmask 64512
        %v370 = vsel %vm369, %v352, 0
        %v372 = vsel %vm369, %v368, 0
        %374 = vmatprep.subr.mxu0 0.0
        %375 = vmatpush1.xpose.msra.mxu0 0.0
        %376 = vmatprep.subr.mxu0 0.0
        %377 = vmatpush1.xpose.msra.mxu0 0.0
        %378 = vmatprep.subr.mxu0 0.0
        %379 = vmatpush1.xpose.msra.mxu0 0.0
        %380 = vmatprep.subr.mxu0 0.0
        %381 = vmatpush1.xpose.msra.mxu0 0.0
        %382 = vmatprep.subr.mxu0 0.0
        %383 = vmatpush1.xpose.msra.mxu0 0.0
        %384 = vmatprep.subr.mxu0 0.0
        %385 = vmatpush1.xpose.msra.mxu0 0.0
        %386 = vmatprep.subr.mxu0 0.0
        %387 = vmatpush1.xpose.msra.mxu0 0.0
        %388 = vmatprep.subr.mxu0 0.0
        %389 = vmatpush1.xpose.msra.mxu0 0.0
        %390 = vmatprep.subr.mxu0 0.0
        %391 = vmatpush1.xpose.msra.mxu0 0.0
        %392 = vmatprep.subr.mxu0 0.0
        %393 = vmatpush1.xpose.msra.mxu0 0.0
        %394 = vmatprep.subr.mxu0 0.0
        %395 = vmatpush1.xpose.msra.mxu0 0.0
        %396 = vmatprep.subr.mxu0 0.0
        %397 = vmatpush1.xpose.msra.mxu0 0.0
        %398 = vmatprep.subr.mxu0 0.0
        %399 = vmatpush1.xpose.msra.mxu0 0.0
        %400 = vmatprep.subr.mxu0 0.0
        %401 = vmatpush1.xpose.msra.mxu0 0.0
        %402 = vmatprep.subr.mxu0 0.0
        %403 = vmatpush1.xpose.msra.mxu0 0.0
        %404 = vmatprep.subr.mxu0 0.0
        %405 = vmatpush1.xpose.msra.mxu0 %v372
        %406 = vmatprep.subr.mxu0 0.0
        %407 = vmatpush2.xpose.msra.mxu0 0.0
        %408 = vmatprep.subr.mxu0 0.0
        %409 = vmatpush2.xpose.msra.mxu0 0.0
        %410 = vmatprep.subr.mxu0 0.0
        %411 = vmatpush2.xpose.msra.mxu0 0.0
        %412 = vmatprep.subr.mxu0 0.0
        %413 = vmatpush2.xpose.msra.mxu0 0.0
        %414 = vmatprep.subr.mxu0 0.0
        %415 = vmatpush2.xpose.msra.mxu0 0.0
        %416 = vmatprep.subr.mxu0 0.0
        %417 = vmatpush2.xpose.msra.mxu0 0.0
        %418 = vmatprep.subr.mxu0 0.0
        %419 = vmatpush2.xpose.msra.mxu0 0.0
        %420 = vmatprep.subr.mxu0 0.0
        %421 = vmatpush2.xpose.msra.mxu0 0.0
        %422 = vmatprep.subr.mxu0 0.0
        %423 = vmatpush2.xpose.msra.mxu0 0.0
        %424 = vmatprep.subr.mxu0 0.0
        %425 = vmatpush2.xpose.msra.mxu0 0.0
        %426 = vmatprep.subr.mxu0 0.0
        %427 = vmatpush2.xpose.msra.mxu0 0.0
        %428 = vmatprep.subr.mxu0 0.0
        %429 = vmatpush2.xpose.msra.mxu0 0.0
        %430 = vmatprep.subr.mxu0 0.0
        %431 = vmatpush2.xpose.msra.mxu0 0.0
        %432 = vmatprep.subr.mxu0 0.0
        %433 = vmatpush2.xpose.msra.mxu0 0.0
        %434 = vmatprep.subr.mxu0 0.0
        %435 = vmatpush2.xpose.msra.mxu0 0.0
        %436 = vmatprep.subr.mxu0 0.0
        %437 = vmatpush2.xpose.msra.mxu0 0.0
        %438 = vmatprep.mubr.f32.mxu0 0.0
        %439 = vmatmul.mubr.f32.gmra.mxu0 %v370
        %v440 = vpop.f32.mrf.mxu0
        %v441 = vadd.f32 0.0, %v440
        %v442 = vpop.f32.mrf.mxu0
        %443 = vdwg.mxu0
        %v444 = vsel %vm369, %v441, -inf
        %445 = vmax.xlane.f32.xlu0 %v444
        %v446 = vpop.xlane.xlu0 %445
        %v447 = vsub.f32 %v441, %v446
        %v448 = vmul.f32 %v447, 1.442695
        %v449 = vpow.pop %v448
        %v450 = vsel %vm369, %v449, 0.0
        %451 = vadd.xlane.f32.xlu0 %v450
        %v452 = vpop.xlane.xlu0 %451
        %453 = vrot.lane.b32.xlu0 %v352, 64
        %v454 = vpop.permute.xlu0 %453
        %v457 = vsel %vm369, %v449, 0
        %459 = vmatprep.subr.mxu0 0.0
        %460 = vmatpush1.msra.mxu0 0.0
        %461 = vmatprep.subr.mxu0 0.0
        %462 = vmatpush1.msra.mxu0 0.0
        %463 = vmatprep.subr.mxu0 0.0
        %464 = vmatpush1.msra.mxu0 0.0
        %465 = vmatprep.subr.mxu0 0.0
        %466 = vmatpush1.msra.mxu0 0.0
        %467 = vmatprep.subr.mxu0 0.0
        %468 = vmatpush1.msra.mxu0 0.0
        %469 = vmatprep.subr.mxu0 0.0
        %470 = vmatpush1.msra.mxu0 0.0
        %471 = vmatprep.subr.mxu0 0.0
        %472 = vmatpush1.msra.mxu0 0.0
        %473 = vmatprep.subr.mxu0 0.0
        %474 = vmatpush1.msra.mxu0 0.0
        %475 = vmatprep.subr.mxu0 0.0
        %476 = vmatpush1.msra.mxu0 0.0
        %477 = vmatprep.subr.mxu0 0.0
        %478 = vmatpush1.msra.mxu0 0.0
        %479 = vmatprep.subr.mxu0 0.0
        %480 = vmatpush1.msra.mxu0 0.0
        %481 = vmatprep.subr.mxu0 0.0
        %482 = vmatpush1.msra.mxu0 0.0
        %483 = vmatprep.subr.mxu0 0.0
        %484 = vmatpush1.msra.mxu0 0.0
        %485 = vmatprep.subr.mxu0 0.0
        %486 = vmatpush1.msra.mxu0 0.0
        %487 = vmatprep.subr.mxu0 0.0
        %488 = vmatpush1.msra.mxu0 0.0
        %489 = vmatprep.subr.mxu0 0.0
        %490 = vmatpush1.msra.mxu0 %v454
        %491 = vmatprep.subr.mxu0 0.0
        %492 = vmatpush2.msra.mxu0 0.0
        %493 = vmatprep.subr.mxu0 0.0
        %494 = vmatpush2.msra.mxu0 0.0
        %495 = vmatprep.subr.mxu0 0.0
        %496 = vmatpush2.msra.mxu0 0.0
        %497 = vmatprep.subr.mxu0 0.0
        %498 = vmatpush2.msra.mxu0 0.0
        %499 = vmatprep.subr.mxu0 0.0
        %500 = vmatpush2.msra.mxu0 0.0
        %501 = vmatprep.subr.mxu0 0.0
        %502 = vmatpush2.msra.mxu0 0.0
        %503 = vmatprep.subr.mxu0 0.0
        %504 = vmatpush2.msra.mxu0 0.0
        %505 = vmatprep.subr.mxu0 0.0
        %506 = vmatpush2.msra.mxu0 0.0
        %507 = vmatprep.subr.mxu0 0.0
        %508 = vmatpush2.msra.mxu0 0.0
        %509 = vmatprep.subr.mxu0 0.0
        %510 = vmatpush2.msra.mxu0 0.0
        %511 = vmatprep.subr.mxu0 0.0
        %512 = vmatpush2.msra.mxu0 0.0
        %513 = vmatprep.subr.mxu0 0.0
        %514 = vmatpush2.msra.mxu0 0.0
        %515 = vmatprep.subr.mxu0 0.0
        %516 = vmatpush2.msra.mxu0 0.0
        %517 = vmatprep.subr.mxu0 0.0
        %518 = vmatpush2.msra.mxu0 0.0
        %519 = vmatprep.subr.mxu0 0.0
        %520 = vmatpush2.msra.mxu0 0.0
        %521 = vmatprep.subr.mxu0 0.0
        %522 = vmatpush2.msra.mxu0 0.0
        %523 = vmatprep.mubr.f32.mxu0 0.0
        %524 = vmatmul.mubr.f32.gmra.mxu0 %v457
        %v525 = vpop.f32.mrf.mxu0
        %v526 = vadd.f32 0.0, %v525
        %v527 = vpop.f32.mrf.mxu0
        %528 = vdwg.mxu0
        %v529 = vrcp.pop %v452
        %v530 = vmul.f32 %v526, %v529
        %v532 = vsel %vm369, %v530, 0
        %534 = vmatprep.subr.mxu0 0.0
        %535 = vmatpush1.msra.mxu0 0.0
        %536 = vmatprep.subr.mxu0 0.0
        %537 = vmatpush1.msra.mxu0 0.0
        %538 = vmatprep.subr.mxu0 0.0
        %539 = vmatpush1.msra.mxu0 0.0
        %540 = vmatprep.subr.mxu0 0.0
        %541 = vmatpush1.msra.mxu0 0.0
        %542 = vmatprep.subr.mxu0 0.0
        %543 = vmatpush1.msra.mxu0 0.0
        %544 = vmatprep.subr.mxu0 0.0
        %545 = vmatpush1.msra.mxu0 0.0
        %546 = vmatprep.subr.mxu0 0.0
        %547 = vmatpush1.msra.mxu0 0.0
        %548 = vmatprep.subr.mxu0 0.0
        %549 = vmatpush1.msra.mxu0 0.0
        %550 = vmatprep.subr.mxu0 0.0
        %551 = vmatpush1.msra.mxu0 0.0
        %552 = vmatprep.subr.mxu0 0.0
        %553 = vmatpush1.msra.mxu0 0.0
        %554 = vmatprep.subr.mxu0 0.0
        %555 = vmatpush1.msra.mxu0 0.0
        %556 = vmatprep.subr.mxu0 0.0
        %557 = vmatpush1.msra.mxu0 0.0
        %558 = vmatprep.subr.mxu0 0.0
        %559 = vmatpush1.msra.mxu0 0.0
        %560 = vmatprep.subr.mxu0 0.0
        %561 = vmatpush1.msra.mxu0 0.0
        %562 = vmatprep.subr.mxu0 0.0
        %563 = vmatpush1.msra.mxu0 0.0
        %564 = vmatprep.subr.mxu0 0.0
        %565 = vmatpush1.msra.mxu0 %v355
        %566 = vmatprep.subr.mxu0 0.0
        %567 = vmatpush2.msra.mxu0 0.0
        %568 = vmatprep.subr.mxu0 0.0
        %569 = vmatpush2.msra.mxu0 0.0
        %570 = vmatprep.subr.mxu0 0.0
        %571 = vmatpush2.msra.mxu0 0.0
        %572 = vmatprep.subr.mxu0 0.0
        %573 = vmatpush2.msra.mxu0 0.0
        %574 = vmatprep.subr.mxu0 0.0
        %575 = vmatpush2.msra.mxu0 0.0
        %576 = vmatprep.subr.mxu0 0.0
        %577 = vmatpush2.msra.mxu0 0.0
        %578 = vmatprep.subr.mxu0 0.0
        %579 = vmatpush2.msra.mxu0 0.0
        %580 = vmatprep.subr.mxu0 0.0
        %581 = vmatpush2.msra.mxu0 0.0
        %582 = vmatprep.subr.mxu0 0.0
        %583 = vmatpush2.msra.mxu0 0.0
        %584 = vmatprep.subr.mxu0 0.0
        %585 = vmatpush2.msra.mxu0 0.0
        %586 = vmatprep.subr.mxu0 0.0
        %587 = vmatpush2.msra.mxu0 0.0
        %588 = vmatprep.subr.mxu0 0.0
        %589 = vmatpush2.msra.mxu0 0.0
        %590 = vmatprep.subr.mxu0 0.0
        %591 = vmatpush2.msra.mxu0 0.0
        %592 = vmatprep.subr.mxu0 0.0
        %593 = vmatpush2.msra.mxu0 0.0
        %594 = vmatprep.subr.mxu0 0.0
        %595 = vmatpush2.msra.mxu0 0.0
        %596 = vmatprep.subr.mxu0 0.0
        %597 = vmatpush2.msra.mxu0 0.0
        %598 = vmatprep.mubr.f32.mxu0 0.0
        %599 = vmatmul.mubr.f32.gmra.mxu0 %v532
        %v600 = vpop.f32.mrf.mxu0
        %v601 = vadd.f32 0.0, %v600
        %v602 = vpop.f32.mrf.mxu0
        %603 = vdwg.mxu0
        %v604 = vadd.f32 %v364, %v601
        %605 = vrot.lane.b32.xlu0 %v352, 120
        %v606 = vpop.permute.xlu0 %605
        %607 = vrot.lane.b32.xlu0 %v352, 88
        %v608 = vpop.permute.xlu0 %607
        %v609 = vsel %vm369, %v606, 0
        %v611 = vsel %vm369, %v608, 0
        %613 = vmatprep.subr.mxu0 0.0
        %614 = vmatpush1.xpose.msra.mxu0 0.0
        %615 = vmatprep.subr.mxu0 0.0
        %616 = vmatpush1.xpose.msra.mxu0 0.0
        %617 = vmatprep.subr.mxu0 0.0
        %618 = vmatpush1.xpose.msra.mxu0 0.0
        %619 = vmatprep.subr.mxu0 0.0
        %620 = vmatpush1.xpose.msra.mxu0 0.0
        %621 = vmatprep.subr.mxu0 0.0
        %622 = vmatpush1.xpose.msra.mxu0 0.0
        %623 = vmatprep.subr.mxu0 0.0
        %624 = vmatpush1.xpose.msra.mxu0 0.0
        %625 = vmatprep.subr.mxu0 0.0
        %626 = vmatpush1.xpose.msra.mxu0 0.0
        %627 = vmatprep.subr.mxu0 0.0
        %628 = vmatpush1.xpose.msra.mxu0 0.0
        %629 = vmatprep.subr.mxu0 0.0
        %630 = vmatpush1.xpose.msra.mxu0 0.0
        %631 = vmatprep.subr.mxu0 0.0
        %632 = vmatpush1.xpose.msra.mxu0 0.0
        %633 = vmatprep.subr.mxu0 0.0
        %634 = vmatpush1.xpose.msra.mxu0 0.0
        %635 = vmatprep.subr.mxu0 0.0
        %636 = vmatpush1.xpose.msra.mxu0 0.0
        %637 = vmatprep.subr.mxu0 0.0
        %638 = vmatpush1.xpose.msra.mxu0 0.0
        %639 = vmatprep.subr.mxu0 0.0
        %640 = vmatpush1.xpose.msra.mxu0 0.0
        %641 = vmatprep.subr.mxu0 0.0
        %642 = vmatpush1.xpose.msra.mxu0 0.0
        %643 = vmatprep.subr.mxu0 0.0
        %644 = vmatpush1.xpose.msra.mxu0 %v611
        %645 = vmatprep.subr.mxu0 0.0
        %646 = vmatpush2.xpose.msra.mxu0 0.0
        %647 = vmatprep.subr.mxu0 0.0
        %648 = vmatpush2.xpose.msra.mxu0 0.0
        %649 = vmatprep.subr.mxu0 0.0
        %650 = vmatpush2.xpose.msra.mxu0 0.0
        %651 = vmatprep.subr.mxu0 0.0
        %652 = vmatpush2.xpose.msra.mxu0 0.0
        %653 = vmatprep.subr.mxu0 0.0
        %654 = vmatpush2.xpose.msra.mxu0 0.0
        %655 = vmatprep.subr.mxu0 0.0
        %656 = vmatpush2.xpose.msra.mxu0 0.0
        %657 = vmatprep.subr.mxu0 0.0
        %658 = vmatpush2.xpose.msra.mxu0 0.0
        %659 = vmatprep.subr.mxu0 0.0
        %660 = vmatpush2.xpose.msra.mxu0 0.0
        %661 = vmatprep.subr.mxu0 0.0
        %662 = vmatpush2.xpose.msra.mxu0 0.0
        %663 = vmatprep.subr.mxu0 0.0
        %664 = vmatpush2.xpose.msra.mxu0 0.0
        %665 = vmatprep.subr.mxu0 0.0
        %666 = vmatpush2.xpose.msra.mxu0 0.0
        %667 = vmatprep.subr.mxu0 0.0
        %668 = vmatpush2.xpose.msra.mxu0 0.0
        %669 = vmatprep.subr.mxu0 0.0
        %670 = vmatpush2.xpose.msra.mxu0 0.0
        %671 = vmatprep.subr.mxu0 0.0
        %672 = vmatpush2.xpose.msra.mxu0 0.0
        %673 = vmatprep.subr.mxu0 0.0
        %674 = vmatpush2.xpose.msra.mxu0 0.0
        %675 = vmatprep.subr.mxu0 0.0
        %676 = vmatpush2.xpose.msra.mxu0 0.0
        %677 = vmatprep.mubr.f32.mxu0 0.0
        %678 = vmatmul.mubr.f32.gmra.mxu0 %v609
        %v679 = vpop.f32.mrf.mxu0
        %v680 = vadd.f32 0.0, %v679
        %v681 = vpop.f32.mrf.mxu0
        %682 = vdwg.mxu0
        %v683 = vsel %vm369, %v680, -inf
        %684 = vmax.xlane.f32.xlu0 %v683
        %v685 = vpop.xlane.xlu0 %684
        %v686 = vsub.f32 %v680, %v685
        %v687 = vmul.f32 %v686, 1.442695
        %v688 = vpow.pop %v687
        %v689 = vsel %vm369, %v688, 0.0
        %690 = vadd.xlane.f32.xlu0 %v689
        %v691 = vpop.xlane.xlu0 %690
        %692 = vrot.lane.b32.xlu0 %v352, 56
        %v693 = vpop.permute.xlu0 %692
        %v696 = vsel %vm369, %v688, 0
        %698 = vmatprep.subr.mxu0 0.0
        %699 = vmatpush1.msra.mxu0 0.0
        %700 = vmatprep.subr.mxu0 0.0
        %701 = vmatpush1.msra.mxu0 0.0
        %702 = vmatprep.subr.mxu0 0.0
        %703 = vmatpush1.msra.mxu0 0.0
        %704 = vmatprep.subr.mxu0 0.0
        %705 = vmatpush1.msra.mxu0 0.0
        %706 = vmatprep.subr.mxu0 0.0
        %707 = vmatpush1.msra.mxu0 0.0
        %708 = vmatprep.subr.mxu0 0.0
        %709 = vmatpush1.msra.mxu0 0.0
        %710 = vmatprep.subr.mxu0 0.0
        %711 = vmatpush1.msra.mxu0 0.0
        %712 = vmatprep.subr.mxu0 0.0
        %713 = vmatpush1.msra.mxu0 0.0
        %714 = vmatprep.subr.mxu0 0.0
        %715 = vmatpush1.msra.mxu0 0.0
        %716 = vmatprep.subr.mxu0 0.0
        %717 = vmatpush1.msra.mxu0 0.0
        %718 = vmatprep.subr.mxu0 0.0
        %719 = vmatpush1.msra.mxu0 0.0
        %720 = vmatprep.subr.mxu0 0.0
        %721 = vmatpush1.msra.mxu0 0.0
        %722 = vmatprep.subr.mxu0 0.0
        %723 = vmatpush1.msra.mxu0 0.0
        %724 = vmatprep.subr.mxu0 0.0
        %725 = vmatpush1.msra.mxu0 0.0
        %726 = vmatprep.subr.mxu0 0.0
        %727 = vmatpush1.msra.mxu0 0.0
        %728 = vmatprep.subr.mxu0 0.0
        %729 = vmatpush1.msra.mxu0 %v693
        %730 = vmatprep.subr.mxu0 0.0
        %731 = vmatpush2.msra.mxu0 0.0
        %732 = vmatprep.subr.mxu0 0.0
        %733 = vmatpush2.msra.mxu0 0.0
        %734 = vmatprep.subr.mxu0 0.0
        %735 = vmatpush2.msra.mxu0 0.0
        %736 = vmatprep.subr.mxu0 0.0
        %737 = vmatpush2.msra.mxu0 0.0
        %738 = vmatprep.subr.mxu0 0.0
        %739 = vmatpush2.msra.mxu0 0.0
        %740 = vmatprep.subr.mxu0 0.0
        %741 = vmatpush2.msra.mxu0 0.0
        %742 = vmatprep.subr.mxu0 0.0
        %743 = vmatpush2.msra.mxu0 0.0
        %744 = vmatprep.subr.mxu0 0.0
        %745 = vmatpush2.msra.mxu0 0.0
        %746 = vmatprep.subr.mxu0 0.0
        %747 = vmatpush2.msra.mxu0 0.0
        %748 = vmatprep.subr.mxu0 0.0
        %749 = vmatpush2.msra.mxu0 0.0
        %750 = vmatprep.subr.mxu0 0.0
        %751 = vmatpush2.msra.mxu0 0.0
        %752 = vmatprep.subr.mxu0 0.0
        %753 = vmatpush2.msra.mxu0 0.0
        %754 = vmatprep.subr.mxu0 0.0
        %755 = vmatpush2.msra.mxu0 0.0
        %756 = vmatprep.subr.mxu0 0.0
        %757 = vmatpush2.msra.mxu0 0.0
        %758 = vmatprep.subr.mxu0 0.0
        %759 = vmatpush2.msra.mxu0 0.0
        %760 = vmatprep.subr.mxu0 0.0
        %761 = vmatpush2.msra.mxu0 0.0
        %762 = vmatprep.mubr.f32.mxu0 0.0
        %763 = vmatmul.mubr.f32.gmra.mxu0 %v696
        %v764 = vpop.f32.mrf.mxu0
        %v765 = vadd.f32 0.0, %v764
        %v766 = vpop.f32.mrf.mxu0
        %767 = vdwg.mxu0
        %v768 = vrcp.pop %v691
        %v769 = vmul.f32 %v765, %v768
        %v771 = vsel %vm369, %v769, 0
        %773 = vmatprep.subr.mxu0 0.0
        %774 = vmatpush1.msra.mxu0 0.0
        %775 = vmatprep.subr.mxu0 0.0
        %776 = vmatpush1.msra.mxu0 0.0
        %777 = vmatprep.subr.mxu0 0.0
        %778 = vmatpush1.msra.mxu0 0.0
        %779 = vmatprep.subr.mxu0 0.0
        %780 = vmatpush1.msra.mxu0 0.0
        %781 = vmatprep.subr.mxu0 0.0
        %782 = vmatpush1.msra.mxu0 0.0
        %783 = vmatprep.subr.mxu0 0.0
        %784 = vmatpush1.msra.mxu0 0.0
        %785 = vmatprep.subr.mxu0 0.0
        %786 = vmatpush1.msra.mxu0 0.0
        %787 = vmatprep.subr.mxu0 0.0
        %788 = vmatpush1.msra.mxu0 0.0
        %789 = vmatprep.subr.mxu0 0.0
        %790 = vmatpush1.msra.mxu0 0.0
        %791 = vmatprep.subr.mxu0 0.0
        %792 = vmatpush1.msra.mxu0 0.0
        %793 = vmatprep.subr.mxu0 0.0
        %794 = vmatpush1.msra.mxu0 0.0
        %795 = vmatprep.subr.mxu0 0.0
        %796 = vmatpush1.msra.mxu0 0.0
        %797 = vmatprep.subr.mxu0 0.0
        %798 = vmatpush1.msra.mxu0 0.0
        %799 = vmatprep.subr.mxu0 0.0
        %800 = vmatpush1.msra.mxu0 0.0
        %801 = vmatprep.subr.mxu0 0.0
        %802 = vmatpush1.msra.mxu0 0.0
        %803 = vmatprep.subr.mxu0 0.0
        %804 = vmatpush1.msra.mxu0 %v356
        %805 = vmatprep.subr.mxu0 0.0
        %806 = vmatpush2.msra.mxu0 0.0
        %807 = vmatprep.subr.mxu0 0.0
        %808 = vmatpush2.msra.mxu0 0.0
        %809 = vmatprep.subr.mxu0 0.0
        %810 = vmatpush2.msra.mxu0 0.0
        %811 = vmatprep.subr.mxu0 0.0
        %812 = vmatpush2.msra.mxu0 0.0
        %813 = vmatprep.subr.mxu0 0.0
        %814 = vmatpush2.msra.mxu0 0.0
        %815 = vmatprep.subr.mxu0 0.0
        %816 = vmatpush2.msra.mxu0 0.0
        %817 = vmatprep.subr.mxu0 0.0
        %818 = vmatpush2.msra.mxu0 0.0
        %819 = vmatprep.subr.mxu0 0.0
        %820 = vmatpush2.msra.mxu0 0.0
        %821 = vmatprep.subr.mxu0 0.0
        %822 = vmatpush2.msra.mxu0 0.0
        %823 = vmatprep.subr.mxu0 0.0
        %824 = vmatpush2.msra.mxu0 0.0
        %825 = vmatprep.subr.mxu0 0.0
        %826 = vmatpush2.msra.mxu0 0.0
        %827 = vmatprep.subr.mxu0 0.0
        %828 = vmatpush2.msra.mxu0 0.0
        %829 = vmatprep.subr.mxu0 0.0
        %830 = vmatpush2.msra.mxu0 0.0
        %831 = vmatprep.subr.mxu0 0.0
        %832 = vmatpush2.msra.mxu0 0.0
        %833 = vmatprep.subr.mxu0 0.0
        %834 = vmatpush2.msra.mxu0 0.0
        %835 = vmatprep.subr.mxu0 0.0
        %836 = vmatpush2.msra.mxu0 0.0
        %837 = vmatprep.mubr.f32.mxu0 0.0
        %838 = vmatmul.mubr.f32.gmra.mxu0 %v771
        %v839 = vpop.f32.mrf.mxu0
        %v840 = vadd.f32 0.0, %v839
        %v841 = vpop.f32.mrf.mxu0
        %842 = vdwg.mxu0
        %v843 = vadd.f32 %v604, %v840
        %844 = vrot.lane.b32.xlu0 %v352, 112
        %v845 = vpop.permute.xlu0 %844
        %846 = vrot.lane.b32.xlu0 %v352, 80
        %v847 = vpop.permute.xlu0 %846
        %v848 = vsel %vm369, %v845, 0
        %v850 = vsel %vm369, %v847, 0
        %852 = vmatprep.subr.mxu0 0.0
        %853 = vmatpush1.xpose.msra.mxu0 0.0
        %854 = vmatprep.subr.mxu0 0.0
        %855 = vmatpush1.xpose.msra.mxu0 0.0
        %856 = vmatprep.subr.mxu0 0.0
        %857 = vmatpush1.xpose.msra.mxu0 0.0
        %858 = vmatprep.subr.mxu0 0.0
        %859 = vmatpush1.xpose.msra.mxu0 0.0
        %860 = vmatprep.subr.mxu0 0.0
        %861 = vmatpush1.xpose.msra.mxu0 0.0
        %862 = vmatprep.subr.mxu0 0.0
        %863 = vmatpush1.xpose.msra.mxu0 0.0
        %864 = vmatprep.subr.mxu0 0.0
        %865 = vmatpush1.xpose.msra.mxu0 0.0
        %866 = vmatprep.subr.mxu0 0.0
        %867 = vmatpush1.xpose.msra.mxu0 0.0
        %868 = vmatprep.subr.mxu0 0.0
        %869 = vmatpush1.xpose.msra.mxu0 0.0
        %870 = vmatprep.subr.mxu0 0.0
        %871 = vmatpush1.xpose.msra.mxu0 0.0
        %872 = vmatprep.subr.mxu0 0.0
        %873 = vmatpush1.xpose.msra.mxu0 0.0
        %874 = vmatprep.subr.mxu0 0.0
        %875 = vmatpush1.xpose.msra.mxu0 0.0
        %876 = vmatprep.subr.mxu0 0.0
        %877 = vmatpush1.xpose.msra.mxu0 0.0
        %878 = vmatprep.subr.mxu0 0.0
        %879 = vmatpush1.xpose.msra.mxu0 0.0
        %880 = vmatprep.subr.mxu0 0.0
        %881 = vmatpush1.xpose.msra.mxu0 0.0
        %882 = vmatprep.subr.mxu0 0.0
        %883 = vmatpush1.xpose.msra.mxu0 %v850
        %884 = vmatprep.subr.mxu0 0.0
        %885 = vmatpush2.xpose.msra.mxu0 0.0
        %886 = vmatprep.subr.mxu0 0.0
        %887 = vmatpush2.xpose.msra.mxu0 0.0
        %888 = vmatprep.subr.mxu0 0.0
        %889 = vmatpush2.xpose.msra.mxu0 0.0
        %890 = vmatprep.subr.mxu0 0.0
        %891 = vmatpush2.xpose.msra.mxu0 0.0
        %892 = vmatprep.subr.mxu0 0.0
        %893 = vmatpush2.xpose.msra.mxu0 0.0
        %894 = vmatprep.subr.mxu0 0.0
        %895 = vmatpush2.xpose.msra.mxu0 0.0
        %896 = vmatprep.subr.mxu0 0.0
        %897 = vmatpush2.xpose.msra.mxu0 0.0
        %898 = vmatprep.subr.mxu0 0.0
        %899 = vmatpush2.xpose.msra.mxu0 0.0
        %900 = vmatprep.subr.mxu0 0.0
        %901 = vmatpush2.xpose.msra.mxu0 0.0
        %902 = vmatprep.subr.mxu0 0.0
        %903 = vmatpush2.xpose.msra.mxu0 0.0
        %904 = vmatprep.subr.mxu0 0.0
        %905 = vmatpush2.xpose.msra.mxu0 0.0
        %906 = vmatprep.subr.mxu0 0.0
        %907 = vmatpush2.xpose.msra.mxu0 0.0
        %908 = vmatprep.subr.mxu0 0.0
        %909 = vmatpush2.xpose.msra.mxu0 0.0
        %910 = vmatprep.subr.mxu0 0.0
        %911 = vmatpush2.xpose.msra.mxu0 0.0
        %912 = vmatprep.subr.mxu0 0.0
        %913 = vmatpush2.xpose.msra.mxu0 0.0
        %914 = vmatprep.subr.mxu0 0.0
        %915 = vmatpush2.xpose.msra.mxu0 0.0
        %916 = vmatprep.mubr.f32.mxu0 0.0
        %917 = vmatmul.mubr.f32.gmra.mxu0 %v848
        %v918 = vpop.f32.mrf.mxu0
        %v919 = vadd.f32 0.0, %v918
        %v920 = vpop.f32.mrf.mxu0
        %921 = vdwg.mxu0
        %v922 = vsel %vm369, %v919, -inf
        %923 = vmax.xlane.f32.xlu0 %v922
        %v924 = vpop.xlane.xlu0 %923
        %v925 = vsub.f32 %v919, %v924
        %v926 = vmul.f32 %v925, 1.442695
        %v927 = vpow.pop %v926
        %v928 = vsel %vm369, %v927, 0.0
        %929 = vadd.xlane.f32.xlu0 %v928
        %v930 = vpop.xlane.xlu0 %929
        %931 = vrot.lane.b32.xlu0 %v352, 48
        %v932 = vpop.permute.xlu0 %931
        %v935 = vsel %vm369, %v927, 0
        %937 = vmatprep.subr.mxu0 0.0
        %938 = vmatpush1.msra.mxu0 0.0
        %939 = vmatprep.subr.mxu0 0.0
        %940 = vmatpush1.msra.mxu0 0.0
        %941 = vmatprep.subr.mxu0 0.0
        %942 = vmatpush1.msra.mxu0 0.0
        %943 = vmatprep.subr.mxu0 0.0
        %944 = vmatpush1.msra.mxu0 0.0
        %945 = vmatprep.subr.mxu0 0.0
        %946 = vmatpush1.msra.mxu0 0.0
        %947 = vmatprep.subr.mxu0 0.0
        %948 = vmatpush1.msra.mxu0 0.0
        %949 = vmatprep.subr.mxu0 0.0
        %950 = vmatpush1.msra.mxu0 0.0
        %951 = vmatprep.subr.mxu0 0.0
        %952 = vmatpush1.msra.mxu0 0.0
        %953 = vmatprep.subr.mxu0 0.0
        %954 = vmatpush1.msra.mxu0 0.0
        %955 = vmatprep.subr.mxu0 0.0
        %956 = vmatpush1.msra.mxu0 0.0
        %957 = vmatprep.subr.mxu0 0.0
        %958 = vmatpush1.msra.mxu0 0.0
        %959 = vmatprep.subr.mxu0 0.0
        %960 = vmatpush1.msra.mxu0 0.0
        %961 = vmatprep.subr.mxu0 0.0
        %962 = vmatpush1.msra.mxu0 0.0
        %963 = vmatprep.subr.mxu0 0.0
        %964 = vmatpush1.msra.mxu0 0.0
        %965 = vmatprep.subr.mxu0 0.0
        %966 = vmatpush1.msra.mxu0 0.0
        %967 = vmatprep.subr.mxu0 0.0
        %968 = vmatpush1.msra.mxu0 %v932
        %969 = vmatprep.subr.mxu0 0.0
        %970 = vmatpush2.msra.mxu0 0.0
        %971 = vmatprep.subr.mxu0 0.0
        %972 = vmatpush2.msra.mxu0 0.0
        %973 = vmatprep.subr.mxu0 0.0
        %974 = vmatpush2.msra.mxu0 0.0
        %975 = vmatprep.subr.mxu0 0.0
        %976 = vmatpush2.msra.mxu0 0.0
        %977 = vmatprep.subr.mxu0 0.0
        %978 = vmatpush2.msra.mxu0 0.0
        %979 = vmatprep.subr.mxu0 0.0
        %980 = vmatpush2.msra.mxu0 0.0
        %981 = vmatprep.subr.mxu0 0.0
        %982 = vmatpush2.msra.mxu0 0.0
        %983 = vmatprep.subr.mxu0 0.0
        %984 = vmatpush2.msra.mxu0 0.0
        %985 = vmatprep.subr.mxu0 0.0
        %986 = vmatpush2.msra.mxu0 0.0
        %987 = vmatprep.subr.mxu0 0.0
        %988 = vmatpush2.msra.mxu0 0.0
        %989 = vmatprep.subr.mxu0 0.0
        %990 = vmatpush2.msra.mxu0 0.0
        %991 = vmatprep.subr.mxu0 0.0
        %992 = vmatpush2.msra.mxu0 0.0
        %993 = vmatprep.subr.mxu0 0.0
        %994 = vmatpush2.msra.mxu0 0.0
        %995 = vmatprep.subr.mxu0 0.0
        %996 = vmatpush2.msra.mxu0 0.0
        %997 = vmatprep.subr.mxu0 0.0
        %998 = vmatpush2.msra.mxu0 0.0
        %999 = vmatprep.subr.mxu0 0.0
        %1000 = vmatpush2.msra.mxu0 0.0
        %1001 = vmatprep.mubr.f32.mxu0 0.0
        %1002 = vmatmul.mubr.f32.gmra.mxu0 %v935
        %v1003 = vpop.f32.mrf.mxu0
        %v1004 = vadd.f32 0.0, %v1003
        %v1005 = vpop.f32.mrf.mxu0
        %1006 = vdwg.mxu0
        %v1007 = vrcp.pop %v930
        %v1008 = vmul.f32 %v1004, %v1007
        %v1010 = vsel %vm369, %v1008, 0
        %1012 = vmatprep.subr.mxu0 0.0
        %1013 = vmatpush1.msra.mxu0 0.0
        %1014 = vmatprep.subr.mxu0 0.0
        %1015 = vmatpush1.msra.mxu0 0.0
        %1016 = vmatprep.subr.mxu0 0.0
        %1017 = vmatpush1.msra.mxu0 0.0
        %1018 = vmatprep.subr.mxu0 0.0
        %1019 = vmatpush1.msra.mxu0 0.0
        %1020 = vmatprep.subr.mxu0 0.0
        %1021 = vmatpush1.msra.mxu0 0.0
        %1022 = vmatprep.subr.mxu0 0.0
        %1023 = vmatpush1.msra.mxu0 0.0
        %1024 = vmatprep.subr.mxu0 0.0
        %1025 = vmatpush1.msra.mxu0 0.0
        %1026 = vmatprep.subr.mxu0 0.0
        %1027 = vmatpush1.msra.mxu0 0.0
        %1028 = vmatprep.subr.mxu0 0.0
        %1029 = vmatpush1.msra.mxu0 0.0
        %1030 = vmatprep.subr.mxu0 0.0
        %1031 = vmatpush1.msra.mxu0 0.0
        %1032 = vmatprep.subr.mxu0 0.0
        %1033 = vmatpush1.msra.mxu0 0.0
        %1034 = vmatprep.subr.mxu0 0.0
        %1035 = vmatpush1.msra.mxu0 0.0
        %1036 = vmatprep.subr.mxu0 0.0
        %1037 = vmatpush1.msra.mxu0 0.0
        %1038 = vmatprep.subr.mxu0 0.0
        %1039 = vmatpush1.msra.mxu0 0.0
        %1040 = vmatprep.subr.mxu0 0.0
        %1041 = vmatpush1.msra.mxu0 0.0
        %1042 = vmatprep.subr.mxu0 0.0
        %1043 = vmatpush1.msra.mxu0 %v357
        %1044 = vmatprep.subr.mxu0 0.0
        %1045 = vmatpush2.msra.mxu0 0.0
        %1046 = vmatprep.subr.mxu0 0.0
        %1047 = vmatpush2.msra.mxu0 0.0
        %1048 = vmatprep.subr.mxu0 0.0
        %1049 = vmatpush2.msra.mxu0 0.0
        %1050 = vmatprep.subr.mxu0 0.0
        %1051 = vmatpush2.msra.mxu0 0.0
        %1052 = vmatprep.subr.mxu0 0.0
        %1053 = vmatpush2.msra.mxu0 0.0
        %1054 = vmatprep.subr.mxu0 0.0
        %1055 = vmatpush2.msra.mxu0 0.0
        %1056 = vmatprep.subr.mxu0 0.0
        %1057 = vmatpush2.msra.mxu0 0.0
        %1058 = vmatprep.subr.mxu0 0.0
        %1059 = vmatpush2.msra.mxu0 0.0
        %1060 = vmatprep.subr.mxu0 0.0
        %1061 = vmatpush2.msra.mxu0 0.0
        %1062 = vmatprep.subr.mxu0 0.0
        %1063 = vmatpush2.msra.mxu0 0.0
        %1064 = vmatprep.subr.mxu0 0.0
        %1065 = vmatpush2.msra.mxu0 0.0
        %1066 = vmatprep.subr.mxu0 0.0
        %1067 = vmatpush2.msra.mxu0 0.0
        %1068 = vmatprep.subr.mxu0 0.0
        %1069 = vmatpush2.msra.mxu0 0.0
        %1070 = vmatprep.subr.mxu0 0.0
        %1071 = vmatpush2.msra.mxu0 0.0
        %1072 = vmatprep.subr.mxu0 0.0
        %1073 = vmatpush2.msra.mxu0 0.0
        %1074 = vmatprep.subr.mxu0 0.0
        %1075 = vmatpush2.msra.mxu0 0.0
        %1076 = vmatprep.mubr.f32.mxu0 0.0
        %1077 = vmatmul.mubr.f32.gmra.mxu0 %v1010
        %v1078 = vpop.f32.mrf.mxu0
        %v1079 = vadd.f32 0.0, %v1078
        %v1080 = vpop.f32.mrf.mxu0
        %1081 = vdwg.mxu0
        %v1082 = vadd.f32 %v843, %v1079
        %1083 = vrot.lane.b32.xlu0 %v352, 104
        %v1084 = vpop.permute.xlu0 %1083
        %1085 = vrot.lane.b32.xlu0 %v352, 72
        %v1086 = vpop.permute.xlu0 %1085
        %v1087 = vsel %vm369, %v1084, 0
        %v1089 = vsel %vm369, %v1086, 0
        %1091 = vmatprep.subr.mxu0 0.0
        %1092 = vmatpush1.xpose.msra.mxu0 0.0
        %1093 = vmatprep.subr.mxu0 0.0
        %1094 = vmatpush1.xpose.msra.mxu0 0.0
        %1095 = vmatprep.subr.mxu0 0.0
        %1096 = vmatpush1.xpose.msra.mxu0 0.0
        %1097 = vmatprep.subr.mxu0 0.0
        %1098 = vmatpush1.xpose.msra.mxu0 0.0
        %1099 = vmatprep.subr.mxu0 0.0
        %1100 = vmatpush1.xpose.msra.mxu0 0.0
        %1101 = vmatprep.subr.mxu0 0.0
        %1102 = vmatpush1.xpose.msra.mxu0 0.0
        %1103 = vmatprep.subr.mxu0 0.0
        %1104 = vmatpush1.xpose.msra.mxu0 0.0
        %1105 = vmatprep.subr.mxu0 0.0
        %1106 = vmatpush1.xpose.msra.mxu0 0.0
        %1107 = vmatprep.subr.mxu0 0.0
        %1108 = vmatpush1.xpose.msra.mxu0 0.0
        %1109 = vmatprep.subr.mxu0 0.0
        %1110 = vmatpush1.xpose.msra.mxu0 0.0
        %1111 = vmatprep.subr.mxu0 0.0
        %1112 = vmatpush1.xpose.msra.mxu0 0.0
        %1113 = vmatprep.subr.mxu0 0.0
        %1114 = vmatpush1.xpose.msra.mxu0 0.0
        %1115 = vmatprep.subr.mxu0 0.0
        %1116 = vmatpush1.xpose.msra.mxu0 0.0
        %1117 = vmatprep.subr.mxu0 0.0
        %1118 = vmatpush1.xpose.msra.mxu0 0.0
        %1119 = vmatprep.subr.mxu0 0.0
        %1120 = vmatpush1.xpose.msra.mxu0 0.0
        %1121 = vmatprep.subr.mxu0 0.0
        %1122 = vmatpush1.xpose.msra.mxu0 %v1089
        %1123 = vmatprep.subr.mxu0 0.0
        %1124 = vmatpush2.xpose.msra.mxu0 0.0
        %1125 = vmatprep.subr.mxu0 0.0
        %1126 = vmatpush2.xpose.msra.mxu0 0.0
        %1127 = vmatprep.subr.mxu0 0.0
        %1128 = vmatpush2.xpose.msra.mxu0 0.0
        %1129 = vmatprep.subr.mxu0 0.0
        %1130 = vmatpush2.xpose.msra.mxu0 0.0
        %1131 = vmatprep.subr.mxu0 0.0
        %1132 = vmatpush2.xpose.msra.mxu0 0.0
        %1133 = vmatprep.subr.mxu0 0.0
        %1134 = vmatpush2.xpose.msra.mxu0 0.0
        %1135 = vmatprep.subr.mxu0 0.0
        %1136 = vmatpush2.xpose.msra.mxu0 0.0
        %1137 = vmatprep.subr.mxu0 0.0
        %1138 = vmatpush2.xpose.msra.mxu0 0.0
        %1139 = vmatprep.subr.mxu0 0.0
        %1140 = vmatpush2.xpose.msra.mxu0 0.0
        %1141 = vmatprep.subr.mxu0 0.0
        %1142 = vmatpush2.xpose.msra.mxu0 0.0
        %1143 = vmatprep.subr.mxu0 0.0
        %1144 = vmatpush2.xpose.msra.mxu0 0.0
        %1145 = vmatprep.subr.mxu0 0.0
        %1146 = vmatpush2.xpose.msra.mxu0 0.0
        %1147 = vmatprep.subr.mxu0 0.0
        %1148 = vmatpush2.xpose.msra.mxu0 0.0
        %1149 = vmatprep.subr.mxu0 0.0
        %1150 = vmatpush2.xpose.msra.mxu0 0.0
        %1151 = vmatprep.subr.mxu0 0.0
        %1152 = vmatpush2.xpose.msra.mxu0 0.0
        %1153 = vmatprep.subr.mxu0 0.0
        %1154 = vmatpush2.xpose.msra.mxu0 0.0
        %1155 = vmatprep.mubr.f32.mxu0 0.0
        %1156 = vmatmul.mubr.f32.gmra.mxu0 %v1087
        %v1157 = vpop.f32.mrf.mxu0
        %v1158 = vadd.f32 0.0, %v1157
        %v1159 = vpop.f32.mrf.mxu0
        %1160 = vdwg.mxu0
        %v1161 = vsel %vm369, %v1158, -inf
        %1162 = vmax.xlane.f32.xlu0 %v1161
        %v1163 = vpop.xlane.xlu0 %1162
        %v1164 = vsub.f32 %v1158, %v1163
        %v1165 = vmul.f32 %v1164, 1.442695
        %v1166 = vpow.pop %v1165
        %v1167 = vsel %vm369, %v1166, 0.0
        %1168 = vadd.xlane.f32.xlu0 %v1167
        %v1169 = vpop.xlane.xlu0 %1168
        %1170 = vrot.lane.b32.xlu0 %v352, 40
        %v1171 = vpop.permute.xlu0 %1170
        %v1174 = vsel %vm369, %v1166, 0
        %1176 = vmatprep.subr.mxu0 0.0
        %1177 = vmatpush1.msra.mxu0 0.0
        %1178 = vmatprep.subr.mxu0 0.0
        %1179 = vmatpush1.msra.mxu0 0.0
        %1180 = vmatprep.subr.mxu0 0.0
        %1181 = vmatpush1.msra.mxu0 0.0
        %1182 = vmatprep.subr.mxu0 0.0
        %1183 = vmatpush1.msra.mxu0 0.0
        %1184 = vmatprep.subr.mxu0 0.0
        %1185 = vmatpush1.msra.mxu0 0.0
        %1186 = vmatprep.subr.mxu0 0.0
        %1187 = vmatpush1.msra.mxu0 0.0
        %1188 = vmatprep.subr.mxu0 0.0
        %1189 = vmatpush1.msra.mxu0 0.0
        %1190 = vmatprep.subr.mxu0 0.0
        %1191 = vmatpush1.msra.mxu0 0.0
        %1192 = vmatprep.subr.mxu0 0.0
        %1193 = vmatpush1.msra.mxu0 0.0
        %1194 = vmatprep.subr.mxu0 0.0
        %1195 = vmatpush1.msra.mxu0 0.0
        %1196 = vmatprep.subr.mxu0 0.0
        %1197 = vmatpush1.msra.mxu0 0.0
        %1198 = vmatprep.subr.mxu0 0.0
        %1199 = vmatpush1.msra.mxu0 0.0
        %1200 = vmatprep.subr.mxu0 0.0
        %1201 = vmatpush1.msra.mxu0 0.0
        %1202 = vmatprep.subr.mxu0 0.0
        %1203 = vmatpush1.msra.mxu0 0.0
        %1204 = vmatprep.subr.mxu0 0.0
        %1205 = vmatpush1.msra.mxu0 0.0
        %1206 = vmatprep.subr.mxu0 0.0
        %1207 = vmatpush1.msra.mxu0 %v1171
        %1208 = vmatprep.subr.mxu0 0.0
        %1209 = vmatpush2.msra.mxu0 0.0
        %1210 = vmatprep.subr.mxu0 0.0
        %1211 = vmatpush2.msra.mxu0 0.0
        %1212 = vmatprep.subr.mxu0 0.0
        %1213 = vmatpush2.msra.mxu0 0.0
        %1214 = vmatprep.subr.mxu0 0.0
        %1215 = vmatpush2.msra.mxu0 0.0
        %1216 = vmatprep.subr.mxu0 0.0
        %1217 = vmatpush2.msra.mxu0 0.0
        %1218 = vmatprep.subr.mxu0 0.0
        %1219 = vmatpush2.msra.mxu0 0.0
        %1220 = vmatprep.subr.mxu0 0.0
        %1221 = vmatpush2.msra.mxu0 0.0
        %1222 = vmatprep.subr.mxu0 0.0
        %1223 = vmatpush2.msra.mxu0 0.0
        %1224 = vmatprep.subr.mxu0 0.0
        %1225 = vmatpush2.msra.mxu0 0.0
        %1226 = vmatprep.subr.mxu0 0.0
        %1227 = vmatpush2.msra.mxu0 0.0
        %1228 = vmatprep.subr.mxu0 0.0
        %1229 = vmatpush2.msra.mxu0 0.0
        %1230 = vmatprep.subr.mxu0 0.0
        %1231 = vmatpush2.msra.mxu0 0.0
        %1232 = vmatprep.subr.mxu0 0.0
        %1233 = vmatpush2.msra.mxu0 0.0
        %1234 = vmatprep.subr.mxu0 0.0
        %1235 = vmatpush2.msra.mxu0 0.0
        %1236 = vmatprep.subr.mxu0 0.0
        %1237 = vmatpush2.msra.mxu0 0.0
        %1238 = vmatprep.subr.mxu0 0.0
        %1239 = vmatpush2.msra.mxu0 0.0
        %1240 = vmatprep.mubr.f32.mxu0 0.0
        %1241 = vmatmul.mubr.f32.gmra.mxu0 %v1174
        %v1242 = vpop.f32.mrf.mxu0
        %v1243 = vadd.f32 0.0, %v1242
        %v1244 = vpop.f32.mrf.mxu0
        %1245 = vdwg.mxu0
        %v1246 = vrcp.pop %v1169
        %v1247 = vmul.f32 %v1243, %v1246
        %v1249 = vsel %vm369, %v1247, 0
        %1251 = vmatprep.subr.mxu0 0.0
        %1252 = vmatpush1.msra.mxu0 0.0
        %1253 = vmatprep.subr.mxu0 0.0
        %1254 = vmatpush1.msra.mxu0 0.0
        %1255 = vmatprep.subr.mxu0 0.0
        %1256 = vmatpush1.msra.mxu0 0.0
        %1257 = vmatprep.subr.mxu0 0.0
        %1258 = vmatpush1.msra.mxu0 0.0
        %1259 = vmatprep.subr.mxu0 0.0
        %1260 = vmatpush1.msra.mxu0 0.0
        %1261 = vmatprep.subr.mxu0 0.0
        %1262 = vmatpush1.msra.mxu0 0.0
        %1263 = vmatprep.subr.mxu0 0.0
        %1264 = vmatpush1.msra.mxu0 0.0
        %1265 = vmatprep.subr.mxu0 0.0
        %1266 = vmatpush1.msra.mxu0 0.0
        %1267 = vmatprep.subr.mxu0 0.0
        %1268 = vmatpush1.msra.mxu0 0.0
        %1269 = vmatprep.subr.mxu0 0.0
        %1270 = vmatpush1.msra.mxu0 0.0
        %1271 = vmatprep.subr.mxu0 0.0
        %1272 = vmatpush1.msra.mxu0 0.0
        %1273 = vmatprep.subr.mxu0 0.0
        %1274 = vmatpush1.msra.mxu0 0.0
        %1275 = vmatprep.subr.mxu0 0.0
        %1276 = vmatpush1.msra.mxu0 0.0
        %1277 = vmatprep.subr.mxu0 0.0
        %1278 = vmatpush1.msra.mxu0 0.0
        %1279 = vmatprep.subr.mxu0 0.0
        %1280 = vmatpush1.msra.mxu0 0.0
        %1281 = vmatprep.subr.mxu0 0.0
        %1282 = vmatpush1.msra.mxu0 %v358
        %1283 = vmatprep.subr.mxu0 0.0
        %1284 = vmatpush2.msra.mxu0 0.0
        %1285 = vmatprep.subr.mxu0 0.0
        %1286 = vmatpush2.msra.mxu0 0.0
        %1287 = vmatprep.subr.mxu0 0.0
        %1288 = vmatpush2.msra.mxu0 0.0
        %1289 = vmatprep.subr.mxu0 0.0
        %1290 = vmatpush2.msra.mxu0 0.0
        %1291 = vmatprep.subr.mxu0 0.0
        %1292 = vmatpush2.msra.mxu0 0.0
        %1293 = vmatprep.subr.mxu0 0.0
        %1294 = vmatpush2.msra.mxu0 0.0
        %1295 = vmatprep.subr.mxu0 0.0
        %1296 = vmatpush2.msra.mxu0 0.0
        %1297 = vmatprep.subr.mxu0 0.0
        %1298 = vmatpush2.msra.mxu0 0.0
        %1299 = vmatprep.subr.mxu0 0.0
        %1300 = vmatpush2.msra.mxu0 0.0
        %1301 = vmatprep.subr.mxu0 0.0
        %1302 = vmatpush2.msra.mxu0 0.0
        %1303 = vmatprep.subr.mxu0 0.0
        %1304 = vmatpush2.msra.mxu0 0.0
        %1305 = vmatprep.subr.mxu0 0.0
        %1306 = vmatpush2.msra.mxu0 0.0
        %1307 = vmatprep.subr.mxu0 0.0
        %1308 = vmatpush2.msra.mxu0 0.0
        %1309 = vmatprep.subr.mxu0 0.0
        %1310 = vmatpush2.msra.mxu0 0.0
        %1311 = vmatprep.subr.mxu0 0.0
        %1312 = vmatpush2.msra.mxu0 0.0
        %1313 = vmatprep.subr.mxu0 0.0
        %1314 = vmatpush2.msra.mxu0 0.0
        %1315 = vmatprep.mubr.f32.mxu0 0.0
        %1316 = vmatmul.mubr.f32.gmra.mxu0 %v1249
        %v1317 = vpop.f32.mrf.mxu0
        %v1318 = vadd.f32 0.0, %v1317
        %v1319 = vpop.f32.mrf.mxu0
        %1320 = vdwg.mxu0
        %v1321 = vadd.f32 %v1082, %v1318
        %1322 = vst.msk [vmem:[%s268] sm:$0xff] %vm281, %v1321
        %s1323 = sand.u32 %s141, 1
        %s1324 = scalar_lea.sflag [#allocation4], %s1323
        %s1325 = sand.u32 %s141, 1
        %s1326 = smul.addr %s1325, 8
        %s1327 = scalar_lea.vmem [#allocation8], %s1326
        // Predicated region
        $region53: #{tpu_custom_call.1} parent=39 // pred_check
          %p1328 = pneg %p151
        $region54: #{tpu_custom_call.1} parent=39 // pred_check_branch
          %1330 = sbr.rel (%p1328) target = $region56
        $region55: #{tpu_custom_call.1} parent=39 // pred_region
          %s1332 = ssub.s32 128, 128
          %1333 = vsyncadd %s1324, %s1332
          %s1334 = smul.addr %s23, 128
          %s1335 = scalar_lea.hbm %s5, %s1334
          %s1337 = sshll.u32 %s1327, 4
          %s1338 = int_to_ptr.vmem [resolvable:$true] %s1337
          %1340 = dma.vmem_to_hbm [thread:$0]  %s1338, 128, %s1335, %s1324
        $region56: #{tpu_custom_call.1} parent=39 // pred_fallthru
          _
      $region40: #{tpu_custom_call.1} parent=5 // pred_fallthru
        _
      %p1341 = scmp.le.s32.totalorder 2, %s18
      // Predicated region
      $region57: #{tpu_custom_call.1} parent=5 // pred_check
        %p1342 = pneg %p1341
      $region58: #{tpu_custom_call.1} parent=5 // pred_check_branch
        %1344 = sbr.rel (%p1342) target = $region60
      $region59: #{tpu_custom_call.1} parent=5 // pred_region
        %s1345 = ssub.s32 %s18, 2
        // Predicated region
        $region61: #{tpu_custom_call.1} parent=59 // pred_check
          %p1346 = pneg %p157
        $region62: #{tpu_custom_call.1} parent=59 // pred_check_branch
          %1348 = sbr.rel (%p1346) target = $region64
        $region63: #{tpu_custom_call.1} parent=59 // pred_region
          %s1349 = sand.u32 %s142, 1
          %s1350 = scalar_lea.sflag [#allocation4], %s1349
          %s1351 = sand.u32 %s142, 1
          %s1352 = smul.addr %s1351, 8
          %s1353 = scalar_lea.vmem [#allocation8], %s1352
          %1354 = dma.done %s1350, 128
        $region64: #{tpu_custom_call.1} parent=59 // pred_fallthru
          _
      $region60: #{tpu_custom_call.1} parent=5 // pred_fallthru
        _
    $region6: #{tpu_custom_call.1} parent=1 // loop_footer
      %s22 = sadd.s32 1, %s18
    $region7: #{tpu_custom_call.1} parent=1 // loop_footer_branch
      %17 = sbr.rel target = $region3
    $region8: #{tpu_custom_call.1} parent=1 // loop_exit
      _
    %1355 = vsyncpa [#allocation3], 1
    %s1356 = scalar_lea.sflag [#allocation3], 1
    %1357 = vsyncpa %s1356, 1
    %1358 = vsyncpa [#allocation6], 1
    %1359 = vsyncpa [#allocation4], 1
    %s1360 = scalar_lea.sflag [#allocation4], 1
    %1361 = vsyncpa %s1360, 1

</llo_original>
